<compile_context>
chip_gen: v7x
topology: tpu7x:2x2x1
jax: 0.10.0
libtpu: 0.0.40
codegen_flags: <defaults>
</compile_context>

<pallas_src>
import functools

import jax
import jax.numpy as jnp
from jax.experimental import pallas as pl
from jax.experimental.pallas import tpu as pltpu


# --------------------------------- kernel ------------------------------------

def attention1_kernel(x_ref, w_fc_ref, bn_g_ref, bn_b_ref, bn_m_ref, bn_v_ref,
                      w_ch_ref, b_ch_ref, w_fi_ref, b_fi_ref,
                      w_sp_ref, b_sp_ref, w_ke_ref, b_ke_ref,
                      ch_ref, fi_ref, sp_ref, ke_ref,
                      *, temperature, bn_eps):
    x = x_ref[...]                                     # (Bb, C, H, W) f32
    _, _, H, W = x.shape

    # ---- AdaptiveAvgPool2d(1): reduce lanes (W) then sublanes (H) ------------
    pooled = jnp.sum(jnp.sum(x, axis=3), axis=2) * (1.0 / (H * W))   # (Bb, C)

    # ---- fc: 1x1 conv, no bias ----------------------------------------------
    a = jnp.dot(pooled, w_fc_ref[...], preferred_element_type=jnp.float32)  # (Bb, A)

    # ---- BatchNorm2d (eval mode: running stats) + ReLU -----------------------
    inv_std = jax.lax.rsqrt(bn_v_ref[...] + bn_eps)                  # (1, A)
    a = (a - bn_m_ref[...]) * inv_std * bn_g_ref[...] + bn_b_ref[...]
    a = jnp.maximum(a, 0.0)

    inv_t = 1.0 / temperature

    # ---- channel attention: sigmoid(channel_fc(a) / T) -----------------------
    ch = jnp.dot(a, w_ch_ref[...], preferred_element_type=jnp.float32) + b_ch_ref[...]
    ch_ref[...] = jax.nn.sigmoid(ch * inv_t)

    # ---- filter attention: sigmoid(filter_fc(a) / T) -------------------------
    fi = jnp.dot(a, w_fi_ref[...], preferred_element_type=jnp.float32) + b_fi_ref[...]
    fi_ref[...] = jax.nn.sigmoid(fi * inv_t)

    # ---- spatial attention: sigmoid(spatial_fc(a) / T) -----------------------
    sp = jnp.dot(a, w_sp_ref[...], preferred_element_type=jnp.float32) + b_sp_ref[...]
    sp_ref[...] = jax.nn.sigmoid(sp * inv_t)

    # ---- kernel attention: softmax(kernel_fc(a) / T, axis=-1) ----------------
    ke = (jnp.dot(a, w_ke_ref[...], preferred_element_type=jnp.float32)
          + b_ke_ref[...]) * inv_t
    ke = ke - jnp.max(ke, axis=-1, keepdims=True)
    e = jnp.exp(ke)
    ke_ref[...] = e * pl.reciprocal(jnp.sum(e, axis=-1, keepdims=True), approx=False)


# ----------------------------- host-side wrapper ------------------------------

def attention1_forward(x, params, *, kernel_size, kernel_num,
                       temperature=1.0, bn_eps=1e-5, batch_block=None):
    """Returns (channel_attn, filter_attn, spatial_attn, kernel_attn) with the
    same shapes as the PyTorch module's outputs."""
    B, C, H, W = x.shape
    A = params["w_fc"].shape[1]
    C_out = params["w_fi"].shape[1]
    kk = kernel_size * kernel_size

    # TODO(synk): skip-branch configs (func_filter/spatial/kernel == skip return
    # the Python scalar 1.0) are not exercised here; this implements the general
    # (all-branches-active) path.  BatchNorm uses eval-mode running statistics.

    if batch_block is None:
        batch_block = B          # whole batch per grid step -> matmul M = B
    assert B % batch_block == 0
    grid = (B // batch_block,)

    kernel = functools.partial(attention1_kernel,
                               temperature=temperature, bn_eps=bn_eps)

    def full2d(shape):
        return pl.BlockSpec(shape, lambda b: (0, 0))

    def out_spec(d):
        return pl.BlockSpec((batch_block, d), lambda b: (b, 0))

    ch, fi, sp, ke = pl.pallas_call(
        kernel,
        out_shape=(
            jax.ShapeDtypeStruct((B, C), x.dtype),
            jax.ShapeDtypeStruct((B, C_out), x.dtype),
            jax.ShapeDtypeStruct((B, kk), x.dtype),
            jax.ShapeDtypeStruct((B, kernel_num), x.dtype),
        ),
        grid=grid,
        in_specs=[
            pl.BlockSpec((batch_block, C, H, W), lambda b: (b, 0, 0, 0)),  # x
            full2d((C, A)),                                                # fc weight
            full2d((1, A)), full2d((1, A)),                                # bn gamma, beta
            full2d((1, A)), full2d((1, A)),                                # bn mean, var
            full2d((A, C)), full2d((1, C)),                                # channel_fc
            full2d((A, C_out)), full2d((1, C_out)),                        # filter_fc
            full2d((A, kk)), full2d((1, kk)),                              # spatial_fc
            full2d((A, kernel_num)), full2d((1, kernel_num)),              # kernel_fc
        ],
        out_specs=(out_spec(C), out_spec(C_out), out_spec(kk), out_spec(kernel_num)),
        compiler_params=pltpu.CompilerParams(dimension_semantics=("parallel",)),
    )(x, params["w_fc"], params["bn_g"], params["bn_b"], params["bn_m"], params["bn_v"],
      params["w_ch"], params["b_ch"], params["w_fi"], params["b_fi"],
      params["w_sp"], params["b_sp"], params["w_ke"], params["b_ke"])

    channel_attention = ch.reshape(B, C, 1, 1)
    filter_attention = fi.reshape(B, C_out, 1, 1)
    spatial_attention = sp.reshape(B, 1, 1, 1, kernel_size, kernel_size)
    kernel_attention = ke.reshape(B, kernel_num, 1, 1, 1, 1)
    return channel_attention, filter_attention, spatial_attention, kernel_attention


# ------------------------------ reference (pure JAX) ---------------------------

def attention1_reference(x, p, *, kernel_size, kernel_num, temperature=1.0, bn_eps=1e-5):
    B = x.shape[0]
    pooled = jnp.mean(x, axis=(2, 3))
    a = pooled @ p["w_fc"]
    a = (a - p["bn_m"]) * jax.lax.rsqrt(p["bn_v"] + bn_eps) * p["bn_g"] + p["bn_b"]
    a = jnp.maximum(a, 0.0)
    ch = jax.nn.sigmoid((a @ p["w_ch"] + p["b_ch"]) / temperature)
    fi = jax.nn.sigmoid((a @ p["w_fi"] + p["b_fi"]) / temperature)
    sp = jax.nn.sigmoid((a @ p["w_sp"] + p["b_sp"]) / temperature)
    ke = jax.nn.softmax((a @ p["w_ke"] + p["b_ke"]) / temperature, axis=-1)
    return (ch.reshape(B, -1, 1, 1),
            fi.reshape(B, -1, 1, 1),
            sp.reshape(B, 1, 1, 1, kernel_size, kernel_size),
            ke.reshape(B, kernel_num, 1, 1, 1, 1))


# ------------------------------ deterministic params ---------------------------

def init_attention1_params(key, in_planes, out_planes, kernel_size, kernel_num,
                           reduction=0.0625, min_channel=16):
    A = max(int(in_planes * reduction), min_channel)
    ks = jax.random.split(key, 5)

    def kaiming(k, shape, fan_out):
        # kaiming_normal_(mode='fan_out', nonlinearity='relu'): std = sqrt(2 / fan_out)
        return (jax.random.normal(k, shape, jnp.float32)
                * jnp.sqrt(2.0 / fan_out).astype(jnp.float32))

    kk = kernel_size * kernel_size
    params = {
        "w_fc": kaiming(ks[0], (in_planes, A), A),               # (in, out)
        "bn_g": jnp.ones((1, A), jnp.float32),
        "bn_b": jnp.zeros((1, A), jnp.float32),
        "bn_m": jnp.zeros((1, A), jnp.float32),
        "bn_v": jnp.ones((1, A), jnp.float32),
        "w_ch": kaiming(ks[1], (A, in_planes), in_planes),
        "b_ch": jnp.zeros((1, in_planes), jnp.float32),
        "w_fi": kaiming(ks[2], (A, out_planes), out_planes),
        "b_fi": jnp.zeros((1, out_planes), jnp.float32),
        "w_sp": kaiming(ks[3], (A, kk), kk),
        "b_sp": jnp.zeros((1, kk), jnp.float32),
        "w_ke": kaiming(ks[4], (A, kernel_num), kernel_num),
        "b_ke": jnp.zeros((1, kernel_num), jnp.float32),
    }
    return params, A


# ------------------------------------ main -------------------------------------

if __name__ == "__main__":
    # Attention1(in_planes=16, out_planes=32, kernel_size=3, kernel_num=4)
    in_planes, out_planes, kernel_size, kernel_num = 16, 32, 3, 4
    B, H, W = 2, 16, 16
    temperature = 1.0

    key = jax.random.PRNGKey(0)
    kx, kp = jax.random.split(key)
    x = jax.random.normal(kx, (B, in_planes, H, W), jnp.float32)
    params, A = init_attention1_params(kp, in_planes, out_planes, kernel_size, kernel_num)

    outs = attention1_forward(x, params, kernel_size=kernel_size,
                              kernel_num=kernel_num, temperature=temperature)
    outs = jax.block_until_ready(outs)
    ch, fi, sp, ke = outs

    assert ch.shape == (B, in_planes, 1, 1)
    assert fi.shape == (B, out_planes, 1, 1)
    assert sp.shape == (B, 1, 1, 1, kernel_size, kernel_size)
    assert ke.shape == (B, kernel_num, 1, 1, 1, 1)

    refs = attention1_reference(x, params, kernel_size=kernel_size,
                                kernel_num=kernel_num, temperature=temperature)
    for got, ref in zip(outs, refs):
        assert bool(jnp.allclose(got, ref, rtol=1e-4, atol=1e-4))
    # softmax over kernel_num sums to 1
    assert bool(jnp.all(jnp.abs(jnp.sum(ke.reshape(B, kernel_num), axis=1) - 1.0) < 1e-4))

    print("KERNEL_OK")
</pallas_src>

<mosaic_0001>
module attributes {stable_mosaic.version = 11 : i64} {
  func.func @attention1_kernel(%arg0: i32, %arg1: memref<2x16x16x16xf32, #tpu.memory_space<vmem>>, %arg2: memref<16x16xf32, #tpu.memory_space<vmem>>, %arg3: memref<1x16xf32, #tpu.memory_space<vmem>>, %arg4: memref<1x16xf32, #tpu.memory_space<vmem>>, %arg5: memref<1x16xf32, #tpu.memory_space<vmem>>, %arg6: memref<1x16xf32, #tpu.memory_space<vmem>>, %arg7: memref<16x16xf32, #tpu.memory_space<vmem>>, %arg8: memref<1x16xf32, #tpu.memory_space<vmem>>, %arg9: memref<16x32xf32, #tpu.memory_space<vmem>>, %arg10: memref<1x32xf32, #tpu.memory_space<vmem>>, %arg11: memref<16x9xf32, #tpu.memory_space<vmem>>, %arg12: memref<1x9xf32, #tpu.memory_space<vmem>>, %arg13: memref<16x4xf32, #tpu.memory_space<vmem>>, %arg14: memref<1x4xf32, #tpu.memory_space<vmem>>, %arg15: memref<2x16xf32, #tpu.memory_space<vmem>>, %arg16: memref<2x32xf32, #tpu.memory_space<vmem>>, %arg17: memref<2x9xf32, #tpu.memory_space<vmem>>, %arg18: memref<2x4xf32, #tpu.memory_space<vmem>>) attributes {dimension_semantics = [#tpu.dimension_semantics<parallel>], iteration_bounds = array<i64: 1>, scalar_prefetch = 0 : i64, scratch_operands = 0 : i64, tpu.core_type = #tpu.core_type<tc>, window_params = [{transform_indices = @transform_0, window_bounds = array<i64: 2, 16, 16, 16>}, {pipeline_mode = #tpu.pipeline_mode<synchronous>, transform_indices = @transform_1, window_bounds = array<i64: 16, 16>}, {pipeline_mode = #tpu.pipeline_mode<synchronous>, transform_indices = @transform_2, window_bounds = array<i64: 1, 16>}, {pipeline_mode = #tpu.pipeline_mode<synchronous>, transform_indices = @transform_3, window_bounds = array<i64: 1, 16>}, {pipeline_mode = #tpu.pipeline_mode<synchronous>, transform_indices = @transform_4, window_bounds = array<i64: 1, 16>}, {pipeline_mode = #tpu.pipeline_mode<synchronous>, transform_indices = @transform_5, window_bounds = array<i64: 1, 16>}, {pipeline_mode = #tpu.pipeline_mode<synchronous>, transform_indices = @transform_6, window_bounds = array<i64: 16, 16>}, {pipeline_mode = #tpu.pipeline_mode<synchronous>, transform_indices = @transform_7, window_bounds = array<i64: 1, 16>}, {pipeline_mode = #tpu.pipeline_mode<synchronous>, transform_indices = @transform_8, window_bounds = array<i64: 16, 32>}, {pipeline_mode = #tpu.pipeline_mode<synchronous>, transform_indices = @transform_9, window_bounds = array<i64: 1, 32>}, {pipeline_mode = #tpu.pipeline_mode<synchronous>, transform_indices = @transform_10, window_bounds = array<i64: 16, 9>}, {pipeline_mode = #tpu.pipeline_mode<synchronous>, transform_indices = @transform_11, window_bounds = array<i64: 1, 9>}, {pipeline_mode = #tpu.pipeline_mode<synchronous>, transform_indices = @transform_12, window_bounds = array<i64: 16, 4>}, {pipeline_mode = #tpu.pipeline_mode<synchronous>, transform_indices = @transform_13, window_bounds = array<i64: 1, 4>}, {transform_indices = @transform_14, window_bounds = array<i64: 2, 16>}, {transform_indices = @transform_15, window_bounds = array<i64: 2, 32>}, {transform_indices = @transform_16, window_bounds = array<i64: 2, 9>}, {transform_indices = @transform_17, window_bounds = array<i64: 2, 4>}]} {
    %c0 = arith.constant 0 : index
    %c0_0 = arith.constant 0 : index
    %c0_1 = arith.constant 0 : index
    %c0_2 = arith.constant 0 : index
    %0 = vector.load %arg1[%c0, %c0_0, %c0_1, %c0_2] : memref<2x16x16x16xf32, #tpu.memory_space<vmem>>, vector<2x16x16x16xf32>
    %cst = arith.constant dense<0.000000e+00> : vector<2x16x16xf32>
    %1 = vector.multi_reduction <add>, %0, %cst [3] : vector<2x16x16x16xf32> to vector<2x16x16xf32>
    %cst_3 = arith.constant dense<0.000000e+00> : vector<2x16xf32>
    %2 = vector.multi_reduction <add>, %1, %cst_3 [2] : vector<2x16x16xf32> to vector<2x16xf32>
    %cst_4 = arith.constant 3.906250e-03 : f32
    %3 = vector.broadcast %cst_4 : f32 to vector<2x16xf32>
    %4 = arith.mulf %2, %3 : vector<2x16xf32>
    %c0_5 = arith.constant 0 : index
    %c0_6 = arith.constant 0 : index
    %5 = vector.load %arg2[%c0_5, %c0_6] : memref<16x16xf32, #tpu.memory_space<vmem>>, vector<16x16xf32>
    %cst_7 = arith.constant dense<0.000000e+00> : vector<2x16xf32>
    %6 = tpu.matmul %4, %5, %cst_7 {dimension_numbers = #tpu.dot_dimension_numbers<[1], [0], [0], [1], [0, 0, 1, 1], [], []>} : vector<2x16xf32>, vector<16x16xf32>, vector<2x16xf32> -> vector<2x16xf32>
    %c0_8 = arith.constant 0 : index
    %c0_9 = arith.constant 0 : index
    %7 = vector.load %arg6[%c0_8, %c0_9] : memref<1x16xf32, #tpu.memory_space<vmem>>, vector<1x16xf32>
    %cst_10 = arith.constant 9.99999974E-6 : f32
    %8 = vector.broadcast %cst_10 : f32 to vector<1x16xf32>
    %9 = arith.addf %7, %8 : vector<1x16xf32>
    %10 = math.rsqrt %9 : vector<1x16xf32>
    %c0_11 = arith.constant 0 : index
    %c0_12 = arith.constant 0 : index
    %11 = vector.load %arg5[%c0_11, %c0_12] : memref<1x16xf32, #tpu.memory_space<vmem>>, vector<1x16xf32>
    %12 = vector.broadcast %11 : vector<1x16xf32> to vector<2x16xf32>
    %13 = arith.subf %6, %12 : vector<2x16xf32>
    %14 = vector.broadcast %10 : vector<1x16xf32> to vector<2x16xf32>
    %15 = arith.mulf %13, %14 : vector<2x16xf32>
    %c0_13 = arith.constant 0 : index
    %c0_14 = arith.constant 0 : index
    %16 = vector.load %arg3[%c0_13, %c0_14] : memref<1x16xf32, #tpu.memory_space<vmem>>, vector<1x16xf32>
    %17 = vector.broadcast %16 : vector<1x16xf32> to vector<2x16xf32>
    %18 = arith.mulf %15, %17 : vector<2x16xf32>
    %c0_15 = arith.constant 0 : index
    %c0_16 = arith.constant 0 : index
    %19 = vector.load %arg4[%c0_15, %c0_16] : memref<1x16xf32, #tpu.memory_space<vmem>>, vector<1x16xf32>
    %20 = vector.broadcast %19 : vector<1x16xf32> to vector<2x16xf32>
    %21 = arith.addf %18, %20 : vector<2x16xf32>
    %cst_17 = arith.constant 0.000000e+00 : f32
    %22 = vector.broadcast %cst_17 : f32 to vector<2x16xf32>
    %23 = arith.maximumf %21, %22 : vector<2x16xf32>
    %c0_18 = arith.constant 0 : index
    %c0_19 = arith.constant 0 : index
    %24 = vector.load %arg7[%c0_18, %c0_19] : memref<16x16xf32, #tpu.memory_space<vmem>>, vector<16x16xf32>
    %cst_20 = arith.constant dense<0.000000e+00> : vector<2x16xf32>
    %25 = tpu.matmul %23, %24, %cst_20 {dimension_numbers = #tpu.dot_dimension_numbers<[1], [0], [0], [1], [0, 0, 1, 1], [], []>} : vector<2x16xf32>, vector<16x16xf32>, vector<2x16xf32> -> vector<2x16xf32>
    %c0_21 = arith.constant 0 : index
    %c0_22 = arith.constant 0 : index
    %26 = vector.load %arg8[%c0_21, %c0_22] : memref<1x16xf32, #tpu.memory_space<vmem>>, vector<1x16xf32>
    %27 = vector.broadcast %26 : vector<1x16xf32> to vector<2x16xf32>
    %28 = arith.addf %25, %27 : vector<2x16xf32>
    %cst_23 = arith.constant 1.000000e+00 : f32
    %29 = vector.broadcast %cst_23 : f32 to vector<2x16xf32>
    %30 = arith.mulf %28, %29 : vector<2x16xf32>
    %31 = arith.negf %30 : vector<2x16xf32>
    %32 = math.exp %31 : vector<2x16xf32>
    %cst_24 = arith.constant 1.000000e+00 : f32
    %33 = vector.broadcast %cst_24 : f32 to vector<2x16xf32>
    %34 = arith.addf %33, %32 : vector<2x16xf32>
    %35 = arith.divf %33, %34 : vector<2x16xf32>
    %c0_25 = arith.constant 0 : index
    %c0_26 = arith.constant 0 : index
    %36 = vector.load %arg15[%c0_25, %c0_26] : memref<2x16xf32, #tpu.memory_space<vmem>>, vector<2x16xf32>
    tpu.vector_store %arg15[%c0_25, %c0_26], %35 {strides = array<i32>} : memref<2x16xf32, #tpu.memory_space<vmem>>, vector<2x16xf32>,
    %c0_27 = arith.constant 0 : index
    %c0_28 = arith.constant 0 : index
    %37 = vector.load %arg9[%c0_27, %c0_28] : memref<16x32xf32, #tpu.memory_space<vmem>>, vector<16x32xf32>
    %cst_29 = arith.constant dense<0.000000e+00> : vector<2x32xf32>
    %38 = tpu.matmul %23, %37, %cst_29 {dimension_numbers = #tpu.dot_dimension_numbers<[1], [0], [0], [1], [0, 0, 1, 1], [], []>} : vector<2x16xf32>, vector<16x32xf32>, vector<2x32xf32> -> vector<2x32xf32>
    %c0_30 = arith.constant 0 : index
    %c0_31 = arith.constant 0 : index
    %39 = vector.load %arg10[%c0_30, %c0_31] : memref<1x32xf32, #tpu.memory_space<vmem>>, vector<1x32xf32>
    %40 = vector.broadcast %39 : vector<1x32xf32> to vector<2x32xf32>
    %41 = arith.addf %38, %40 : vector<2x32xf32>
    %cst_32 = arith.constant 1.000000e+00 : f32
    %42 = vector.broadcast %cst_32 : f32 to vector<2x32xf32>
    %43 = arith.mulf %41, %42 : vector<2x32xf32>
    %44 = arith.negf %43 : vector<2x32xf32>
    %45 = math.exp %44 : vector<2x32xf32>
    %cst_33 = arith.constant 1.000000e+00 : f32
    %46 = vector.broadcast %cst_33 : f32 to vector<2x32xf32>
    %47 = arith.addf %46, %45 : vector<2x32xf32>
    %48 = arith.divf %46, %47 : vector<2x32xf32>
    %c0_34 = arith.constant 0 : index
    %c0_35 = arith.constant 0 : index
    %49 = vector.load %arg16[%c0_34, %c0_35] : memref<2x32xf32, #tpu.memory_space<vmem>>, vector<2x32xf32>
    tpu.vector_store %arg16[%c0_34, %c0_35], %48 {strides = array<i32>} : memref<2x32xf32, #tpu.memory_space<vmem>>, vector<2x32xf32>,
    %c0_36 = arith.constant 0 : index
    %c0_37 = arith.constant 0 : index
    %50 = vector.load %arg11[%c0_36, %c0_37] : memref<16x9xf32, #tpu.memory_space<vmem>>, vector<16x9xf32>
    %cst_38 = arith.constant dense<0.000000e+00> : vector<2x9xf32>
    %51 = tpu.matmul %23, %50, %cst_38 {dimension_numbers = #tpu.dot_dimension_numbers<[1], [0], [0], [1], [0, 0, 1, 1], [], []>} : vector<2x16xf32>, vector<16x9xf32>, vector<2x9xf32> -> vector<2x9xf32>
    %c0_39 = arith.constant 0 : index
    %c0_40 = arith.constant 0 : index
    %52 = vector.load %arg12[%c0_39, %c0_40] : memref<1x9xf32, #tpu.memory_space<vmem>>, vector<1x9xf32>
    %53 = vector.broadcast %52 : vector<1x9xf32> to vector<2x9xf32>
    %54 = arith.addf %51, %53 : vector<2x9xf32>
    %cst_41 = arith.constant 1.000000e+00 : f32
    %55 = vector.broadcast %cst_41 : f32 to vector<2x9xf32>
    %56 = arith.mulf %54, %55 : vector<2x9xf32>
    %57 = arith.negf %56 : vector<2x9xf32>
    %58 = math.exp %57 : vector<2x9xf32>
    %cst_42 = arith.constant 1.000000e+00 : f32
    %59 = vector.broadcast %cst_42 : f32 to vector<2x9xf32>
    %60 = arith.addf %59, %58 : vector<2x9xf32>
    %61 = arith.divf %59, %60 : vector<2x9xf32>
    %c0_43 = arith.constant 0 : index
    %c0_44 = arith.constant 0 : index
    %62 = vector.load %arg17[%c0_43, %c0_44] : memref<2x9xf32, #tpu.memory_space<vmem>>, vector<2x9xf32>
    tpu.vector_store %arg17[%c0_43, %c0_44], %61 {strides = array<i32>} : memref<2x9xf32, #tpu.memory_space<vmem>>, vector<2x9xf32>,
    %c0_45 = arith.constant 0 : index
    %c0_46 = arith.constant 0 : index
    %63 = vector.load %arg13[%c0_45, %c0_46] : memref<16x4xf32, #tpu.memory_space<vmem>>, vector<16x4xf32>
    %cst_47 = arith.constant dense<0.000000e+00> : vector<2x4xf32>
    %64 = tpu.matmul %23, %63, %cst_47 {dimension_numbers = #tpu.dot_dimension_numbers<[1], [0], [0], [1], [0, 0, 1, 1], [], []>} : vector<2x16xf32>, vector<16x4xf32>, vector<2x4xf32> -> vector<2x4xf32>
    %c0_48 = arith.constant 0 : index
    %c0_49 = arith.constant 0 : index
    %65 = vector.load %arg14[%c0_48, %c0_49] : memref<1x4xf32, #tpu.memory_space<vmem>>, vector<1x4xf32>
    %66 = vector.broadcast %65 : vector<1x4xf32> to vector<2x4xf32>
    %67 = arith.addf %64, %66 : vector<2x4xf32>
    %cst_50 = arith.constant 1.000000e+00 : f32
    %68 = vector.broadcast %cst_50 : f32 to vector<2x4xf32>
    %69 = arith.mulf %67, %68 : vector<2x4xf32>
    %cst_51 = arith.constant dense<0xFF800000> : vector<2xf32>
    %70 = vector.multi_reduction <maximumf>, %69, %cst_51 [1] : vector<2x4xf32> to vector<2xf32>
    %71 = vector.shape_cast %70 : vector<2xf32> to vector<2x1xf32>
    %72 = vector.broadcast %71 : vector<2x1xf32> to vector<2x4xf32>
    %73 = arith.subf %69, %72 : vector<2x4xf32>
    %74 = math.exp %73 : vector<2x4xf32>
    %cst_52 = arith.constant dense<0.000000e+00> : vector<2xf32>
    %75 = vector.multi_reduction <add>, %74, %cst_52 [1] : vector<2x4xf32> to vector<2xf32>
    %76 = vector.shape_cast %75 : vector<2xf32> to vector<2x1xf32>
    %77 = tpu.reciprocal %76 : vector<2x1xf32> -> vector<2x1xf32>
    %78 = vector.broadcast %77 : vector<2x1xf32> to vector<2x4xf32>
    %79 = arith.mulf %74, %78 : vector<2x4xf32>
    %c0_53 = arith.constant 0 : index
    %c0_54 = arith.constant 0 : index
    %80 = vector.load %arg18[%c0_53, %c0_54] : memref<2x4xf32, #tpu.memory_space<vmem>>, vector<2x4xf32>
    tpu.vector_store %arg18[%c0_53, %c0_54], %79 {strides = array<i32>} : memref<2x4xf32, #tpu.memory_space<vmem>>, vector<2x4xf32>,
    return
  }
  func.func @transform_0(%arg0: i32) -> (i32, i32, i32, i32) {
    %c0_i32 = arith.constant 0 : i32
    %c0_i32_0 = arith.constant 0 : i32
    %c0_i32_1 = arith.constant 0 : i32
    %c0_i32_2 = arith.constant 0 : i32
    return %arg0, %c0_i32, %c0_i32_0, %c0_i32_1 : i32, i32, i32, i32
  }
  func.func @transform_1(%arg0: i32) -> (i32, i32) {
    %c0_i32 = arith.constant 0 : i32
    %c0_i32_0 = arith.constant 0 : i32
    %c0_i32_1 = arith.constant 0 : i32
    return %c0_i32, %c0_i32_0 : i32, i32
  }
  func.func @transform_2(%arg0: i32) -> (i32, i32) {
    %c0_i32 = arith.constant 0 : i32
    %c0_i32_0 = arith.constant 0 : i32
    %c0_i32_1 = arith.constant 0 : i32
    return %c0_i32, %c0_i32_0 : i32, i32
  }
  func.func @transform_3(%arg0: i32) -> (i32, i32) {
    %c0_i32 = arith.constant 0 : i32
    %c0_i32_0 = arith.constant 0 : i32
    %c0_i32_1 = arith.constant 0 : i32
    return %c0_i32, %c0_i32_0 : i32, i32
  }
  func.func @transform_4(%arg0: i32) -> (i32, i32) {
    %c0_i32 = arith.constant 0 : i32
    %c0_i32_0 = arith.constant 0 : i32
    %c0_i32_1 = arith.constant 0 : i32
    return %c0_i32, %c0_i32_0 : i32, i32
  }
  func.func @transform_5(%arg0: i32) -> (i32, i32) {
    %c0_i32 = arith.constant 0 : i32
    %c0_i32_0 = arith.constant 0 : i32
    %c0_i32_1 = arith.constant 0 : i32
    return %c0_i32, %c0_i32_0 : i32, i32
  }
  func.func @transform_6(%arg0: i32) -> (i32, i32) {
    %c0_i32 = arith.constant 0 : i32
    %c0_i32_0 = arith.constant 0 : i32
    %c0_i32_1 = arith.constant 0 : i32
    return %c0_i32, %c0_i32_0 : i32, i32
  }
  func.func @transform_7(%arg0: i32) -> (i32, i32) {
    %c0_i32 = arith.constant 0 : i32
    %c0_i32_0 = arith.constant 0 : i32
    %c0_i32_1 = arith.constant 0 : i32
    return %c0_i32, %c0_i32_0 : i32, i32
  }
  func.func @transform_8(%arg0: i32) -> (i32, i32) {
    %c0_i32 = arith.constant 0 : i32
    %c0_i32_0 = arith.constant 0 : i32
    %c0_i32_1 = arith.constant 0 : i32
    return %c0_i32, %c0_i32_0 : i32, i32
  }
  func.func @transform_9(%arg0: i32) -> (i32, i32) {
    %c0_i32 = arith.constant 0 : i32
    %c0_i32_0 = arith.constant 0 : i32
    %c0_i32_1 = arith.constant 0 : i32
    return %c0_i32, %c0_i32_0 : i32, i32
  }
  func.func @transform_10(%arg0: i32) -> (i32, i32) {
    %c0_i32 = arith.constant 0 : i32
    %c0_i32_0 = arith.constant 0 : i32
    %c0_i32_1 = arith.constant 0 : i32
    return %c0_i32, %c0_i32_0 : i32, i32
  }
  func.func @transform_11(%arg0: i32) -> (i32, i32) {
    %c0_i32 = arith.constant 0 : i32
    %c0_i32_0 = arith.constant 0 : i32
    %c0_i32_1 = arith.constant 0 : i32
    return %c0_i32, %c0_i32_0 : i32, i32
  }
  func.func @transform_12(%arg0: i32) -> (i32, i32) {
    %c0_i32 = arith.constant 0 : i32
    %c0_i32_0 = arith.constant 0 : i32
    %c0_i32_1 = arith.constant 0 : i32
    return %c0_i32, %c0_i32_0 : i32, i32
  }
  func.func @transform_13(%arg0: i32) -> (i32, i32) {
    %c0_i32 = arith.constant 0 : i32
    %c0_i32_0 = arith.constant 0 : i32
    %c0_i32_1 = arith.constant 0 : i32
    return %c0_i32, %c0_i32_0 : i32, i32
  }
  func.func @transform_14(%arg0: i32) -> (i32, i32) {
    %c0_i32 = arith.constant 0 : i32
    %c0_i32_0 = arith.constant 0 : i32
    return %arg0, %c0_i32 : i32, i32
  }
  func.func @transform_15(%arg0: i32) -> (i32, i32) {
    %c0_i32 = arith.constant 0 : i32
    %c0_i32_0 = arith.constant 0 : i32
    return %arg0, %c0_i32 : i32, i32
  }
  func.func @transform_16(%arg0: i32) -> (i32, i32) {
    %c0_i32 = arith.constant 0 : i32
    %c0_i32_0 = arith.constant 0 : i32
    return %arg0, %c0_i32 : i32, i32
  }
  func.func @transform_17(%arg0: i32) -> (i32, i32) {
    %c0_i32 = arith.constant 0 : i32
    %c0_i32_0 = arith.constant 0 : i32
    return %arg0, %c0_i32 : i32, i32
  }
}

</mosaic_0001>

<llo_original>
// kernel: tpu_custom_call.1
$region0: #{tpu_custom_call.1}
  #allocation0 [shape = 'u32[]', space=smem, size = 0x4, offset = 0x4, fixed_abs, tag = 'smem constant byte address 0x4 - core index']
  #allocation1 [shape = 'u32[144,128]{1,0:T(1,128)}', space=vmem, size = 0x12000, scoped, tag = 'internal scratch']
  %s0 = inlined_call_operand.hbm [shape: f32[2,16,16,16], index: 0, kind: input, shape index: {}]
  %s1 = inlined_call_operand.vmem [shape: f32[16,16], index: 1, kind: input, shape index: {}]
  %s2 = inlined_call_operand.vmem [shape: f32[1,16], index: 2, kind: input, shape index: {}]
  %s3 = inlined_call_operand.vmem [shape: f32[1,16], index: 3, kind: input, shape index: {}]
  %s4 = inlined_call_operand.hbm [shape: f32[1,16], index: 4, kind: input, shape index: {}]
  %s5 = inlined_call_operand.hbm [shape: f32[1,16], index: 5, kind: input, shape index: {}]
  %s6 = inlined_call_operand.vmem [shape: f32[16,16], index: 6, kind: input, shape index: {}]
  %s7 = inlined_call_operand.hbm [shape: f32[1,16], index: 7, kind: input, shape index: {}]
  %s8 = inlined_call_operand.vmem [shape: f32[16,32], index: 8, kind: input, shape index: {}]
  %s9 = inlined_call_operand.hbm [shape: f32[1,32], index: 9, kind: input, shape index: {}]
  %s10 = inlined_call_operand.hbm [shape: f32[16,9], index: 10, kind: input, shape index: {}]
  %s11 = inlined_call_operand.vmem [shape: f32[1,9], index: 11, kind: input, shape index: {}]
  %s12 = inlined_call_operand.vmem [shape: f32[16,4], index: 12, kind: input, shape index: {}]
  %s13 = inlined_call_operand.vmem [shape: f32[1,4], index: 13, kind: input, shape index: {}]
  %s14 = inlined_call_operand.hbm [shape: f32[2,16], index: 14, kind: output, shape index: {0}]
  %s15 = inlined_call_operand.hbm [shape: f32[2,32], index: 15, kind: output, shape index: {1}]
  %s16 = inlined_call_operand.hbm [shape: f32[2,9], index: 16, kind: output, shape index: {2}]
  %s17 = inlined_call_operand.hbm [shape: f32[2,4], index: 17, kind: output, shape index: {3}]
  %18 = xla_tuple %s14, %s15, %s16, %s17
  %s19 = sld [smem:[#allocation0]]
  $region114: #{tpu_custom_call.1} parent=0
    _
  %s21 = ssub.s32 1, %s19
  %s22 = scalar_select 0, %s21, %s19
  $region1: #{tpu_custom_call.1} parent=0
    #allocation2 [shape = 'u8[262144]{0}', space=vmem, size = 0x40000, scoped, tag = 'input window, operand 0, single buffered']
    #allocation3 [shape = 's32[1]{0}', space=sflag, size = 0x4, scoped, tag = 'scoped memory for tpu_custom_call.1']
    #allocation4 [shape = 's32[1]{0}', space=sflag, size = 0x4, scoped, tag = 'scoped memory for tpu_custom_call.1']
    #allocation5 [shape = 'u8[512]{0}', space=vmem, size = 0x400, scoped, tag = 'input window, operand 4, single buffered']
    #allocation6 [shape = 's32[1]{0}', space=sflag, size = 0x4, scoped, tag = 'scoped memory for tpu_custom_call.1']
    #allocation7 [shape = 'u8[512]{0}', space=vmem, size = 0x400, scoped, tag = 'input window, operand 5, single buffered']
    #allocation8 [shape = 'u8[512]{0}', space=vmem, size = 0x400, scoped, tag = 'input window, operand 7, single buffered']
    #allocation9 [shape = 's32[1]{0}', space=sflag, size = 0x4, scoped, tag = 'scoped memory for tpu_custom_call.1']
    #allocation10 [shape = 'u8[512]{0}', space=vmem, size = 0x400, scoped, tag = 'input window, operand 9, single buffered']
    #allocation11 [shape = 'u8[8192]{0}', space=vmem, size = 0x2000, scoped, tag = 'input window, operand 10, single buffered']
    #allocation12 [shape = 's32[1]{0}', space=sflag, size = 0x4, scoped, tag = 'scoped memory for tpu_custom_call.1']
    #allocation13 [shape = 'u8[1024]{0}', space=vmem, size = 0x400, scoped, tag = 'output window, operand 0, single buffered']
    #allocation14 [shape = 'u8[1024]{0}', space=vmem, size = 0x400, scoped, tag = 'output window, operand 1, single buffered']
    #allocation15 [shape = 's32[1]{0}', space=sflag, size = 0x4, scoped, tag = 'scoped memory for tpu_custom_call.1']
    #allocation16 [shape = 'u8[1024]{0}', space=vmem, size = 0x400, scoped, tag = 'output window, operand 2, single buffered']
    #allocation17 [shape = 'u8[1024]{0}', space=vmem, size = 0x400, scoped, tag = 'output window, operand 3, single buffered']
    #allocation18 [shape = 's32[1]{0}', space=sflag, size = 0x4, scoped, tag = 'scoped memory for tpu_custom_call.1']
    %23 = vsyncpa [#allocation3], 0
    %24 = vsyncpa [#allocation6], 0
    %25 = vsyncpa [#allocation9], 0
    %26 = vsyncpa [#allocation12], 0
    %27 = vsyncpa [#allocation4], 0
    %28 = vsyncpa [#allocation15], 0
    %29 = vsyncpa [#allocation18], 0
    // Predicated region
    $region2: #{tpu_custom_call.1} parent=1 // pred_check
      _
    $region3: #{tpu_custom_call.1} parent=1 // pred_check_branch
      %31 = sbr.rel (0) target = $region5
    $region4: #{tpu_custom_call.1} parent=1 // pred_region
      %s33 = ssub.s32 8192, 8192
      %34 = vsyncadd [#allocation3], %s33
      %s35 = sshll.u32 [#allocation2], 4
      %s36 = int_to_ptr.vmem [resolvable:$true] %s35
      %41 = dma.hbm_to_vmem [thread:$0]  %s0, 8192, %s36, [#allocation3], 128, 128, 8
    $region5: #{tpu_custom_call.1} parent=1 // pred_fallthru
      _
    // Predicated region
    $region6: #{tpu_custom_call.1} parent=1 // pred_check
      _
    $region7: #{tpu_custom_call.1} parent=1 // pred_check_branch
      %43 = sbr.rel (0) target = $region9
    $region8: #{tpu_custom_call.1} parent=1 // pred_region
      _
    $region9: #{tpu_custom_call.1} parent=1 // pred_fallthru
      _
    // Predicated region
    $region10: #{tpu_custom_call.1} parent=1 // pred_check
      _
    $region11: #{tpu_custom_call.1} parent=1 // pred_check_branch
      %45 = sbr.rel (0) target = $region13
    $region12: #{tpu_custom_call.1} parent=1 // pred_region
      _
    $region13: #{tpu_custom_call.1} parent=1 // pred_fallthru
      _
    // Predicated region
    $region14: #{tpu_custom_call.1} parent=1 // pred_check
      _
    $region15: #{tpu_custom_call.1} parent=1 // pred_check_branch
      %47 = sbr.rel (0) target = $region17
    $region16: #{tpu_custom_call.1} parent=1 // pred_region
      _
    $region17: #{tpu_custom_call.1} parent=1 // pred_fallthru
      _
    // Predicated region
    $region18: #{tpu_custom_call.1} parent=1 // pred_check
      _
    $region19: #{tpu_custom_call.1} parent=1 // pred_check_branch
      %49 = sbr.rel (0) target = $region21
    $region20: #{tpu_custom_call.1} parent=1 // pred_region
      %s51 = ssub.s32 16, 16
      %52 = vsyncadd [#allocation6], %s51
      %s54 = sshll.u32 [#allocation5], 4
      %s55 = int_to_ptr.vmem [resolvable:$true] %s54
      %57 = dma.hbm_to_vmem [thread:$0]  %s4, 16, %s55, [#allocation6]
    $region21: #{tpu_custom_call.1} parent=1 // pred_fallthru
      _
    // Predicated region
    $region22: #{tpu_custom_call.1} parent=1 // pred_check
      _
    $region23: #{tpu_custom_call.1} parent=1 // pred_check_branch
      %59 = sbr.rel (0) target = $region25
    $region24: #{tpu_custom_call.1} parent=1 // pred_region
      %s61 = ssub.s32 16, 16
      %62 = vsyncadd [#allocation6], %s61
      %s64 = sshll.u32 [#allocation7], 4
      %s65 = int_to_ptr.vmem [resolvable:$true] %s64
      %67 = dma.hbm_to_vmem [thread:$0]  %s5, 16, %s65, [#allocation6]
    $region25: #{tpu_custom_call.1} parent=1 // pred_fallthru
      _
    // Predicated region
    $region26: #{tpu_custom_call.1} parent=1 // pred_check
      _
    $region27: #{tpu_custom_call.1} parent=1 // pred_check_branch
      %69 = sbr.rel (0) target = $region29
    $region28: #{tpu_custom_call.1} parent=1 // pred_region
      _
    $region29: #{tpu_custom_call.1} parent=1 // pred_fallthru
      _
    // Predicated region
    $region30: #{tpu_custom_call.1} parent=1 // pred_check
      _
    $region31: #{tpu_custom_call.1} parent=1 // pred_check_branch
      %71 = sbr.rel (0) target = $region33
    $region32: #{tpu_custom_call.1} parent=1 // pred_region
      %s73 = ssub.s32 16, 16
      %74 = vsyncadd [#allocation9], %s73
      %s76 = sshll.u32 [#allocation8], 4
      %s77 = int_to_ptr.vmem [resolvable:$true] %s76
      %79 = dma.hbm_to_vmem [thread:$0]  %s7, 16, %s77, [#allocation9]
    $region33: #{tpu_custom_call.1} parent=1 // pred_fallthru
      _
    // Predicated region
    $region34: #{tpu_custom_call.1} parent=1 // pred_check
      _
    $region35: #{tpu_custom_call.1} parent=1 // pred_check_branch
      %81 = sbr.rel (0) target = $region37
    $region36: #{tpu_custom_call.1} parent=1 // pred_region
      _
    $region37: #{tpu_custom_call.1} parent=1 // pred_fallthru
      _
    // Predicated region
    $region38: #{tpu_custom_call.1} parent=1 // pred_check
      _
    $region39: #{tpu_custom_call.1} parent=1 // pred_check_branch
      %83 = sbr.rel (0) target = $region41
    $region40: #{tpu_custom_call.1} parent=1 // pred_region
      %s85 = ssub.s32 16, 16
      %86 = vsyncadd [#allocation9], %s85
      %s88 = sshll.u32 [#allocation10], 4
      %s89 = int_to_ptr.vmem [resolvable:$true] %s88
      %91 = dma.hbm_to_vmem [thread:$0]  %s9, 16, %s89, [#allocation9]
    $region41: #{tpu_custom_call.1} parent=1 // pred_fallthru
      _
    // Predicated region
    $region42: #{tpu_custom_call.1} parent=1 // pred_check
      _
    $region43: #{tpu_custom_call.1} parent=1 // pred_check_branch
      %93 = sbr.rel (0) target = $region45
    $region44: #{tpu_custom_call.1} parent=1 // pred_region
      %s95 = ssub.s32 256, 256
      %96 = vsyncadd [#allocation12], %s95
      %s97 = sshll.u32 [#allocation11], 4
      %s98 = int_to_ptr.vmem [resolvable:$true] %s97
      %103 = dma.hbm_to_vmem [thread:$0]  %s10, 256, %s98, [#allocation12], 128, 128, 8
    $region45: #{tpu_custom_call.1} parent=1 // pred_fallthru
      _
    // Predicated region
    $region46: #{tpu_custom_call.1} parent=1 // pred_check
      _
    $region47: #{tpu_custom_call.1} parent=1 // pred_check_branch
      %105 = sbr.rel (0) target = $region49
    $region48: #{tpu_custom_call.1} parent=1 // pred_region
      _
    $region49: #{tpu_custom_call.1} parent=1 // pred_fallthru
      _
    // Predicated region
    $region50: #{tpu_custom_call.1} parent=1 // pred_check
      _
    $region51: #{tpu_custom_call.1} parent=1 // pred_check_branch
      %107 = sbr.rel (0) target = $region53
    $region52: #{tpu_custom_call.1} parent=1 // pred_region
      _
    $region53: #{tpu_custom_call.1} parent=1 // pred_fallthru
      _
    // Predicated region
    $region54: #{tpu_custom_call.1} parent=1 // pred_check
      _
    $region55: #{tpu_custom_call.1} parent=1 // pred_check_branch
      %109 = sbr.rel (0) target = $region57
    $region56: #{tpu_custom_call.1} parent=1 // pred_region
      _
    $region57: #{tpu_custom_call.1} parent=1 // pred_fallthru
      _
    // Predicated region
    $region58: #{tpu_custom_call.1} parent=1 // pred_check
      _
    $region59: #{tpu_custom_call.1} parent=1 // pred_check_branch
      %111 = sbr.rel (0) target = $region61
    $region60: #{tpu_custom_call.1} parent=1 // pred_region
      %112 = dma.done [#allocation3], 8192
    $region61: #{tpu_custom_call.1} parent=1 // pred_fallthru
      _
    // Predicated region
    $region62: #{tpu_custom_call.1} parent=1 // pred_check
      _
    $region63: #{tpu_custom_call.1} parent=1 // pred_check_branch
      %114 = sbr.rel (0) target = $region65
    $region64: #{tpu_custom_call.1} parent=1 // pred_region
      %115 = dma.done [#allocation6], 16
    $region65: #{tpu_custom_call.1} parent=1 // pred_fallthru
      _
    // Predicated region
    $region66: #{tpu_custom_call.1} parent=1 // pred_check
      _
    $region67: #{tpu_custom_call.1} parent=1 // pred_check_branch
      %117 = sbr.rel (0) target = $region69
    $region68: #{tpu_custom_call.1} parent=1 // pred_region
      %118 = dma.done [#allocation6], 16
    $region69: #{tpu_custom_call.1} parent=1 // pred_fallthru
      _
    // Predicated region
    $region70: #{tpu_custom_call.1} parent=1 // pred_check
      _
    $region71: #{tpu_custom_call.1} parent=1 // pred_check_branch
      %120 = sbr.rel (0) target = $region73
    $region72: #{tpu_custom_call.1} parent=1 // pred_region
      %121 = dma.done [#allocation9], 16
    $region73: #{tpu_custom_call.1} parent=1 // pred_fallthru
      _
    // Predicated region
    $region74: #{tpu_custom_call.1} parent=1 // pred_check
      _
    $region75: #{tpu_custom_call.1} parent=1 // pred_check_branch
      %123 = sbr.rel (0) target = $region77
    $region76: #{tpu_custom_call.1} parent=1 // pred_region
      %124 = dma.done [#allocation9], 16
    $region77: #{tpu_custom_call.1} parent=1 // pred_fallthru
      _
    // Predicated region
    $region78: #{tpu_custom_call.1} parent=1 // pred_check
      _
    $region79: #{tpu_custom_call.1} parent=1 // pred_check_branch
      %126 = sbr.rel (0) target = $region81
    $region80: #{tpu_custom_call.1} parent=1 // pred_region
      %127 = dma.done [#allocation12], 256
    $region81: #{tpu_custom_call.1} parent=1 // pred_fallthru
      _
    %v128 = vld [vmem:[#allocation2] sm:$0xff]
    %v129 = vld [vmem:[#allocation2 + $0x8] sm:$0xff]
    %v130 = vld [vmem:[#allocation2 + $0x10] sm:$0xff]
    %v131 = vld [vmem:[#allocation2 + $0x18] sm:$0xff]
    %v132 = vld [vmem:[#allocation2 + $0x20] sm:$0xff]
    %v133 = vld [vmem:[#allocation2 + $0x28] sm:$0xff]
    %v134 = vld [vmem:[#allocation2 + $0x30] sm:$0xff]
    %v135 = vld [vmem:[#allocation2 + $0x38] sm:$0xff]
    %v136 = vld [vmem:[#allocation2 + $0x40] sm:$0xff]
    %v137 = vld [vmem:[#allocation2 + $0x48] sm:$0xff]
    %v138 = vld [vmem:[#allocation2 + $0x50] sm:$0xff]
    %v139 = vld [vmem:[#allocation2 + $0x58] sm:$0xff]
    %v140 = vld [vmem:[#allocation2 + $0x60] sm:$0xff]
    %v141 = vld [vmem:[#allocation2 + $0x68] sm:$0xff]
    %v142 = vld [vmem:[#allocation2 + $0x70] sm:$0xff]
    %v143 = vld [vmem:[#allocation2 + $0x78] sm:$0xff]
    %v144 = vld [vmem:[#allocation2 + $0x80] sm:$0xff]
    %v145 = vld [vmem:[#allocation2 + $0x88] sm:$0xff]
    %v146 = vld [vmem:[#allocation2 + $0x90] sm:$0xff]
    %v147 = vld [vmem:[#allocation2 + $0x98] sm:$0xff]
    %v148 = vld [vmem:[#allocation2 + $0xa0] sm:$0xff]
    %v149 = vld [vmem:[#allocation2 + $0xa8] sm:$0xff]
    %v150 = vld [vmem:[#allocation2 + $0xb0] sm:$0xff]
    %v151 = vld [vmem:[#allocation2 + $0xb8] sm:$0xff]
    %v152 = vld [vmem:[#allocation2 + $0xc0] sm:$0xff]
    %v153 = vld [vmem:[#allocation2 + $0xc8] sm:$0xff]
    %v154 = vld [vmem:[#allocation2 + $0xd0] sm:$0xff]
    %v155 = vld [vmem:[#allocation2 + $0xd8] sm:$0xff]
    %v156 = vld [vmem:[#allocation2 + $0xe0] sm:$0xff]
    %v157 = vld [vmem:[#allocation2 + $0xe8] sm:$0xff]
    %v158 = vld [vmem:[#allocation2 + $0xf0] sm:$0xff]
    %v159 = vld [vmem:[#allocation2 + $0xf8] sm:$0xff]
    %v160 = vld [vmem:[#allocation2 + $0x100] sm:$0xff]
    %v161 = vld [vmem:[#allocation2 + $0x108] sm:$0xff]
    %v162 = vld [vmem:[#allocation2 + $0x110] sm:$0xff]
    %v163 = vld [vmem:[#allocation2 + $0x118] sm:$0xff]
    %v164 = vld [vmem:[#allocation2 + $0x120] sm:$0xff]
    %v165 = vld [vmem:[#allocation2 + $0x128] sm:$0xff]
    %v166 = vld [vmem:[#allocation2 + $0x130] sm:$0xff]
    %v167 = vld [vmem:[#allocation2 + $0x138] sm:$0xff]
    %v168 = vld [vmem:[#allocation2 + $0x140] sm:$0xff]
    %v169 = vld [vmem:[#allocation2 + $0x148] sm:$0xff]
    %v170 = vld [vmem:[#allocation2 + $0x150] sm:$0xff]
    %v171 = vld [vmem:[#allocation2 + $0x158] sm:$0xff]
    %v172 = vld [vmem:[#allocation2 + $0x160] sm:$0xff]
    %v173 = vld [vmem:[#allocation2 + $0x168] sm:$0xff]
    %v174 = vld [vmem:[#allocation2 + $0x170] sm:$0xff]
    %v175 = vld [vmem:[#allocation2 + $0x178] sm:$0xff]
    %v176 = vld [vmem:[#allocation2 + $0x180] sm:$0xff]
    %v177 = vld [vmem:[#allocation2 + $0x188] sm:$0xff]
    %v178 = vld [vmem:[#allocation2 + $0x190] sm:$0xff]
    %v179 = vld [vmem:[#allocation2 + $0x198] sm:$0xff]
    %v180 = vld [vmem:[#allocation2 + $0x1a0] sm:$0xff]
    %v181 = vld [vmem:[#allocation2 + $0x1a8] sm:$0xff]
    %v182 = vld [vmem:[#allocation2 + $0x1b0] sm:$0xff]
    %v183 = vld [vmem:[#allocation2 + $0x1b8] sm:$0xff]
    %v184 = vld [vmem:[#allocation2 + $0x1c0] sm:$0xff]
    %v185 = vld [vmem:[#allocation2 + $0x1c8] sm:$0xff]
    %v186 = vld [vmem:[#allocation2 + $0x1d0] sm:$0xff]
    %v187 = vld [vmem:[#allocation2 + $0x1d8] sm:$0xff]
    %v188 = vld [vmem:[#allocation2 + $0x1e0] sm:$0xff]
    %v189 = vld [vmem:[#allocation2 + $0x1e8] sm:$0xff]
    %v190 = vld [vmem:[#allocation2 + $0x1f0] sm:$0xff]
    %v191 = vld [vmem:[#allocation2 + $0x1f8] sm:$0xff]
    %vm192 = vcmask 130048
    %v193 = vsel %vm192, %v128, 0.0
    %194 = vadd.xlane.f32.xlu0 %v193
    %v195 = vpop.xlane.xlu0 %194
    %v196 = vsel %vm192, %v129, 0.0
    %197 = vadd.xlane.f32.xlu0 %v196
    %v198 = vpop.xlane.xlu0 %197
    %v199 = vsel %vm192, %v130, 0.0
    %200 = vadd.xlane.f32.xlu0 %v199
    %v201 = vpop.xlane.xlu0 %200
    %v202 = vsel %vm192, %v131, 0.0
    %203 = vadd.xlane.f32.xlu0 %v202
    %v204 = vpop.xlane.xlu0 %203
    %v205 = vsel %vm192, %v132, 0.0
    %206 = vadd.xlane.f32.xlu0 %v205
    %v207 = vpop.xlane.xlu0 %206
    %v208 = vsel %vm192, %v133, 0.0
    %209 = vadd.xlane.f32.xlu0 %v208
    %v210 = vpop.xlane.xlu0 %209
    %v211 = vsel %vm192, %v134, 0.0
    %212 = vadd.xlane.f32.xlu0 %v211
    %v213 = vpop.xlane.xlu0 %212
    %v214 = vsel %vm192, %v135, 0.0
    %215 = vadd.xlane.f32.xlu0 %v214
    %v216 = vpop.xlane.xlu0 %215
    %v217 = vsel %vm192, %v136, 0.0
    %218 = vadd.xlane.f32.xlu0 %v217
    %v219 = vpop.xlane.xlu0 %218
    %v220 = vsel %vm192, %v137, 0.0
    %221 = vadd.xlane.f32.xlu0 %v220
    %v222 = vpop.xlane.xlu0 %221
    %v223 = vsel %vm192, %v138, 0.0
    %224 = vadd.xlane.f32.xlu0 %v223
    %v225 = vpop.xlane.xlu0 %224
    %v226 = vsel %vm192, %v139, 0.0
    %227 = vadd.xlane.f32.xlu0 %v226
    %v228 = vpop.xlane.xlu0 %227
    %v229 = vsel %vm192, %v140, 0.0
    %230 = vadd.xlane.f32.xlu0 %v229
    %v231 = vpop.xlane.xlu0 %230
    %v232 = vsel %vm192, %v141, 0.0
    %233 = vadd.xlane.f32.xlu0 %v232
    %v234 = vpop.xlane.xlu0 %233
    %v235 = vsel %vm192, %v142, 0.0
    %236 = vadd.xlane.f32.xlu0 %v235
    %v237 = vpop.xlane.xlu0 %236
    %v238 = vsel %vm192, %v143, 0.0
    %239 = vadd.xlane.f32.xlu0 %v238
    %v240 = vpop.xlane.xlu0 %239
    %v241 = vsel %vm192, %v144, 0.0
    %242 = vadd.xlane.f32.xlu0 %v241
    %v243 = vpop.xlane.xlu0 %242
    %v244 = vsel %vm192, %v145, 0.0
    %245 = vadd.xlane.f32.xlu0 %v244
    %v246 = vpop.xlane.xlu0 %245
    %v247 = vsel %vm192, %v146, 0.0
    %248 = vadd.xlane.f32.xlu0 %v247
    %v249 = vpop.xlane.xlu0 %248
    %v250 = vsel %vm192, %v147, 0.0
    %251 = vadd.xlane.f32.xlu0 %v250
    %v252 = vpop.xlane.xlu0 %251
    %v253 = vsel %vm192, %v148, 0.0
    %254 = vadd.xlane.f32.xlu0 %v253
    %v255 = vpop.xlane.xlu0 %254
    %v256 = vsel %vm192, %v149, 0.0
    %257 = vadd.xlane.f32.xlu0 %v256
    %v258 = vpop.xlane.xlu0 %257
    %v259 = vsel %vm192, %v150, 0.0
    %260 = vadd.xlane.f32.xlu0 %v259
    %v261 = vpop.xlane.xlu0 %260
    %v262 = vsel %vm192, %v151, 0.0
    %263 = vadd.xlane.f32.xlu0 %v262
    %v264 = vpop.xlane.xlu0 %263
    %v265 = vsel %vm192, %v152, 0.0
    %266 = vadd.xlane.f32.xlu0 %v265
    %v267 = vpop.xlane.xlu0 %266
    %v268 = vsel %vm192, %v153, 0.0
    %269 = vadd.xlane.f32.xlu0 %v268
    %v270 = vpop.xlane.xlu0 %269
    %v271 = vsel %vm192, %v154, 0.0
    %272 = vadd.xlane.f32.xlu0 %v271
    %v273 = vpop.xlane.xlu0 %272
    %v274 = vsel %vm192, %v155, 0.0
    %275 = vadd.xlane.f32.xlu0 %v274
    %v276 = vpop.xlane.xlu0 %275
    %v277 = vsel %vm192, %v156, 0.0
    %278 = vadd.xlane.f32.xlu0 %v277
    %v279 = vpop.xlane.xlu0 %278
    %v280 = vsel %vm192, %v157, 0.0
    %281 = vadd.xlane.f32.xlu0 %v280
    %v282 = vpop.xlane.xlu0 %281
    %v283 = vsel %vm192, %v158, 0.0
    %284 = vadd.xlane.f32.xlu0 %v283
    %v285 = vpop.xlane.xlu0 %284
    %v286 = vsel %vm192, %v159, 0.0
    %287 = vadd.xlane.f32.xlu0 %v286
    %v288 = vpop.xlane.xlu0 %287
    %v289 = vsel %vm192, %v160, 0.0
    %290 = vadd.xlane.f32.xlu0 %v289
    %v291 = vpop.xlane.xlu0 %290
    %v292 = vsel %vm192, %v161, 0.0
    %293 = vadd.xlane.f32.xlu0 %v292
    %v294 = vpop.xlane.xlu0 %293
    %v295 = vsel %vm192, %v162, 0.0
    %296 = vadd.xlane.f32.xlu0 %v295
    %v297 = vpop.xlane.xlu0 %296
    %v298 = vsel %vm192, %v163, 0.0
    %299 = vadd.xlane.f32.xlu0 %v298
    %v300 = vpop.xlane.xlu0 %299
    %v301 = vsel %vm192, %v164, 0.0
    %302 = vadd.xlane.f32.xlu0 %v301
    %v303 = vpop.xlane.xlu0 %302
    %v304 = vsel %vm192, %v165, 0.0
    %305 = vadd.xlane.f32.xlu0 %v304
    %v306 = vpop.xlane.xlu0 %305
    %v307 = vsel %vm192, %v166, 0.0
    %308 = vadd.xlane.f32.xlu0 %v307
    %v309 = vpop.xlane.xlu0 %308
    %v310 = vsel %vm192, %v167, 0.0
    %311 = vadd.xlane.f32.xlu0 %v310
    %v312 = vpop.xlane.xlu0 %311
    %v313 = vsel %vm192, %v168, 0.0
    %314 = vadd.xlane.f32.xlu0 %v313
    %v315 = vpop.xlane.xlu0 %314
    %v316 = vsel %vm192, %v169, 0.0
    %317 = vadd.xlane.f32.xlu0 %v316
    %v318 = vpop.xlane.xlu0 %317
    %v319 = vsel %vm192, %v170, 0.0
    %320 = vadd.xlane.f32.xlu0 %v319
    %v321 = vpop.xlane.xlu0 %320
    %v322 = vsel %vm192, %v171, 0.0
    %323 = vadd.xlane.f32.xlu0 %v322
    %v324 = vpop.xlane.xlu0 %323
    %v325 = vsel %vm192, %v172, 0.0
    %326 = vadd.xlane.f32.xlu0 %v325
    %v327 = vpop.xlane.xlu0 %326
    %v328 = vsel %vm192, %v173, 0.0
    %329 = vadd.xlane.f32.xlu0 %v328
    %v330 = vpop.xlane.xlu0 %329
    %v331 = vsel %vm192, %v174, 0.0
    %332 = vadd.xlane.f32.xlu0 %v331
    %v333 = vpop.xlane.xlu0 %332
    %v334 = vsel %vm192, %v175, 0.0
    %335 = vadd.xlane.f32.xlu0 %v334
    %v336 = vpop.xlane.xlu0 %335
    %v337 = vsel %vm192, %v176, 0.0
    %338 = vadd.xlane.f32.xlu0 %v337
    %v339 = vpop.xlane.xlu0 %338
    %v340 = vsel %vm192, %v177, 0.0
    %341 = vadd.xlane.f32.xlu0 %v340
    %v342 = vpop.xlane.xlu0 %341
    %v343 = vsel %vm192, %v178, 0.0
    %344 = vadd.xlane.f32.xlu0 %v343
    %v345 = vpop.xlane.xlu0 %344
    %v346 = vsel %vm192, %v179, 0.0
    %347 = vadd.xlane.f32.xlu0 %v346
    %v348 = vpop.xlane.xlu0 %347
    %v349 = vsel %vm192, %v180, 0.0
    %350 = vadd.xlane.f32.xlu0 %v349
    %v351 = vpop.xlane.xlu0 %350
    %v352 = vsel %vm192, %v181, 0.0
    %353 = vadd.xlane.f32.xlu0 %v352
    %v354 = vpop.xlane.xlu0 %353
    %v355 = vsel %vm192, %v182, 0.0
    %356 = vadd.xlane.f32.xlu0 %v355
    %v357 = vpop.xlane.xlu0 %356
    %v358 = vsel %vm192, %v183, 0.0
    %359 = vadd.xlane.f32.xlu0 %v358
    %v360 = vpop.xlane.xlu0 %359
    %v361 = vsel %vm192, %v184, 0.0
    %362 = vadd.xlane.f32.xlu0 %v361
    %v363 = vpop.xlane.xlu0 %362
    %v364 = vsel %vm192, %v185, 0.0
    %365 = vadd.xlane.f32.xlu0 %v364
    %v366 = vpop.xlane.xlu0 %365
    %v367 = vsel %vm192, %v186, 0.0
    %368 = vadd.xlane.f32.xlu0 %v367
    %v369 = vpop.xlane.xlu0 %368
    %v370 = vsel %vm192, %v187, 0.0
    %371 = vadd.xlane.f32.xlu0 %v370
    %v372 = vpop.xlane.xlu0 %371
    %v373 = vsel %vm192, %v188, 0.0
    %374 = vadd.xlane.f32.xlu0 %v373
    %v375 = vpop.xlane.xlu0 %374
    %v376 = vsel %vm192, %v189, 0.0
    %377 = vadd.xlane.f32.xlu0 %v376
    %v378 = vpop.xlane.xlu0 %377
    %v379 = vsel %vm192, %v190, 0.0
    %380 = vadd.xlane.f32.xlu0 %v379
    %v381 = vpop.xlane.xlu0 %380
    %v382 = vsel %vm192, %v191, 0.0
    %383 = vadd.xlane.f32.xlu0 %v382
    %v384 = vpop.xlane.xlu0 %383
    %v449 = vlaneseq
    %v450 = vand.u32 %v449, 127
    %v451 = vlaneseq
    %v452 = vshrl.u32 %v451, 7
    %v453 = vsub.s32 %v450, %v452
    %v454 = vrot.slane %v195, %v453
    %v455 = vadd.s32 %v450, 4294967288
    %v456 = vlaneseq
    %v457 = vshrl.u32 %v456, 7
    %v458 = vsub.s32 %v455, %v457
    %v459 = vrot.slane %v198, %v458
    %vm460 = vcmask 130112
    %v461 = vsel %vm460, %v459, %v454
    %v462 = vlaneseq
    %v463 = vshrl.u32 %v462, 7
    %v464 = vsub.s32 %v450, %v463
    %v465 = vrot.slane %v201, %v464
    %v466 = vlaneseq
    %v467 = vshrl.u32 %v466, 7
    %v468 = vsub.s32 %v455, %v467
    %v469 = vrot.slane %v204, %v468
    %v470 = vsel %vm460, %v469, %v465
    %v471 = vlaneseq
    %v472 = vshrl.u32 %v471, 7
    %v473 = vsub.s32 %v450, %v472
    %v474 = vrot.slane %v207, %v473
    %v475 = vlaneseq
    %v476 = vshrl.u32 %v475, 7
    %v477 = vsub.s32 %v455, %v476
    %v478 = vrot.slane %v210, %v477
    %v479 = vsel %vm460, %v478, %v474
    %v480 = vlaneseq
    %v481 = vshrl.u32 %v480, 7
    %v482 = vsub.s32 %v450, %v481
    %v483 = vrot.slane %v213, %v482
    %v484 = vlaneseq
    %v485 = vshrl.u32 %v484, 7
    %v486 = vsub.s32 %v455, %v485
    %v487 = vrot.slane %v216, %v486
    %v488 = vsel %vm460, %v487, %v483
    %v489 = vlaneseq
    %v490 = vshrl.u32 %v489, 7
    %v491 = vsub.s32 %v450, %v490
    %v492 = vrot.slane %v219, %v491
    %v493 = vlaneseq
    %v494 = vshrl.u32 %v493, 7
    %v495 = vsub.s32 %v455, %v494
    %v496 = vrot.slane %v222, %v495
    %v497 = vsel %vm460, %v496, %v492
    %v498 = vlaneseq
    %v499 = vshrl.u32 %v498, 7
    %v500 = vsub.s32 %v450, %v499
    %v501 = vrot.slane %v225, %v500
    %v502 = vlaneseq
    %v503 = vshrl.u32 %v502, 7
    %v504 = vsub.s32 %v455, %v503
    %v505 = vrot.slane %v228, %v504
    %v506 = vsel %vm460, %v505, %v501
    %v507 = vlaneseq
    %v508 = vshrl.u32 %v507, 7
    %v509 = vsub.s32 %v450, %v508
    %v510 = vrot.slane %v231, %v509
    %v511 = vlaneseq
    %v512 = vshrl.u32 %v511, 7
    %v513 = vsub.s32 %v455, %v512
    %v514 = vrot.slane %v234, %v513
    %v515 = vsel %vm460, %v514, %v510
    %v516 = vlaneseq
    %v517 = vshrl.u32 %v516, 7
    %v518 = vsub.s32 %v450, %v517
    %v519 = vrot.slane %v237, %v518
    %v520 = vlaneseq
    %v521 = vshrl.u32 %v520, 7
    %v522 = vsub.s32 %v455, %v521
    %v523 = vrot.slane %v240, %v522
    %v524 = vsel %vm460, %v523, %v519
    %v525 = vlaneseq
    %v526 = vshrl.u32 %v525, 7
    %v527 = vsub.s32 %v450, %v526
    %v528 = vrot.slane %v243, %v527
    %v529 = vlaneseq
    %v530 = vshrl.u32 %v529, 7
    %v531 = vsub.s32 %v455, %v530
    %v532 = vrot.slane %v246, %v531
    %v533 = vsel %vm460, %v532, %v528
    %v534 = vlaneseq
    %v535 = vshrl.u32 %v534, 7
    %v536 = vsub.s32 %v450, %v535
    %v537 = vrot.slane %v249, %v536
    %v538 = vlaneseq
    %v539 = vshrl.u32 %v538, 7
    %v540 = vsub.s32 %v455, %v539
    %v541 = vrot.slane %v252, %v540
    %v542 = vsel %vm460, %v541, %v537
    %v543 = vlaneseq
    %v544 = vshrl.u32 %v543, 7
    %v545 = vsub.s32 %v450, %v544
    %v546 = vrot.slane %v255, %v545
    %v547 = vlaneseq
    %v548 = vshrl.u32 %v547, 7
    %v549 = vsub.s32 %v455, %v548
    %v550 = vrot.slane %v258, %v549
    %v551 = vsel %vm460, %v550, %v546
    %v552 = vlaneseq
    %v553 = vshrl.u32 %v552, 7
    %v554 = vsub.s32 %v450, %v553
    %v555 = vrot.slane %v261, %v554
    %v556 = vlaneseq
    %v557 = vshrl.u32 %v556, 7
    %v558 = vsub.s32 %v455, %v557
    %v559 = vrot.slane %v264, %v558
    %v560 = vsel %vm460, %v559, %v555
    %v561 = vlaneseq
    %v562 = vshrl.u32 %v561, 7
    %v563 = vsub.s32 %v450, %v562
    %v564 = vrot.slane %v267, %v563
    %v565 = vlaneseq
    %v566 = vshrl.u32 %v565, 7
    %v567 = vsub.s32 %v455, %v566
    %v568 = vrot.slane %v270, %v567
    %v569 = vsel %vm460, %v568, %v564
    %v570 = vlaneseq
    %v571 = vshrl.u32 %v570, 7
    %v572 = vsub.s32 %v450, %v571
    %v573 = vrot.slane %v273, %v572
    %v574 = vlaneseq
    %v575 = vshrl.u32 %v574, 7
    %v576 = vsub.s32 %v455, %v575
    %v577 = vrot.slane %v276, %v576
    %v578 = vsel %vm460, %v577, %v573
    %v579 = vlaneseq
    %v580 = vshrl.u32 %v579, 7
    %v581 = vsub.s32 %v450, %v580
    %v582 = vrot.slane %v279, %v581
    %v583 = vlaneseq
    %v584 = vshrl.u32 %v583, 7
    %v585 = vsub.s32 %v455, %v584
    %v586 = vrot.slane %v282, %v585
    %v587 = vsel %vm460, %v586, %v582
    %v588 = vlaneseq
    %v589 = vshrl.u32 %v588, 7
    %v590 = vsub.s32 %v450, %v589
    %v591 = vrot.slane %v285, %v590
    %v592 = vlaneseq
    %v593 = vshrl.u32 %v592, 7
    %v594 = vsub.s32 %v455, %v593
    %v595 = vrot.slane %v288, %v594
    %v596 = vsel %vm460, %v595, %v591
    %v597 = vlaneseq
    %v598 = vshrl.u32 %v597, 7
    %v599 = vsub.s32 %v450, %v598
    %v600 = vrot.slane %v291, %v599
    %v601 = vlaneseq
    %v602 = vshrl.u32 %v601, 7
    %v603 = vsub.s32 %v455, %v602
    %v604 = vrot.slane %v294, %v603
    %v605 = vsel %vm460, %v604, %v600
    %v606 = vlaneseq
    %v607 = vshrl.u32 %v606, 7
    %v608 = vsub.s32 %v450, %v607
    %v609 = vrot.slane %v297, %v608
    %v610 = vlaneseq
    %v611 = vshrl.u32 %v610, 7
    %v612 = vsub.s32 %v455, %v611
    %v613 = vrot.slane %v300, %v612
    %v614 = vsel %vm460, %v613, %v609
    %v615 = vlaneseq
    %v616 = vshrl.u32 %v615, 7
    %v617 = vsub.s32 %v450, %v616
    %v618 = vrot.slane %v303, %v617
    %v619 = vlaneseq
    %v620 = vshrl.u32 %v619, 7
    %v621 = vsub.s32 %v455, %v620
    %v622 = vrot.slane %v306, %v621
    %v623 = vsel %vm460, %v622, %v618
    %v624 = vlaneseq
    %v625 = vshrl.u32 %v624, 7
    %v626 = vsub.s32 %v450, %v625
    %v627 = vrot.slane %v309, %v626
    %v628 = vlaneseq
    %v629 = vshrl.u32 %v628, 7
    %v630 = vsub.s32 %v455, %v629
    %v631 = vrot.slane %v312, %v630
    %v632 = vsel %vm460, %v631, %v627
    %v633 = vlaneseq
    %v634 = vshrl.u32 %v633, 7
    %v635 = vsub.s32 %v450, %v634
    %v636 = vrot.slane %v315, %v635
    %v637 = vlaneseq
    %v638 = vshrl.u32 %v637, 7
    %v639 = vsub.s32 %v455, %v638
    %v640 = vrot.slane %v318, %v639
    %v641 = vsel %vm460, %v640, %v636
    %v642 = vlaneseq
    %v643 = vshrl.u32 %v642, 7
    %v644 = vsub.s32 %v450, %v643
    %v645 = vrot.slane %v321, %v644
    %v646 = vlaneseq
    %v647 = vshrl.u32 %v646, 7
    %v648 = vsub.s32 %v455, %v647
    %v649 = vrot.slane %v324, %v648
    %v650 = vsel %vm460, %v649, %v645
    %v651 = vlaneseq
    %v652 = vshrl.u32 %v651, 7
    %v653 = vsub.s32 %v450, %v652
    %v654 = vrot.slane %v327, %v653
    %v655 = vlaneseq
    %v656 = vshrl.u32 %v655, 7
    %v657 = vsub.s32 %v455, %v656
    %v658 = vrot.slane %v330, %v657
    %v659 = vsel %vm460, %v658, %v654
    %v660 = vlaneseq
    %v661 = vshrl.u32 %v660, 7
    %v662 = vsub.s32 %v450, %v661
    %v663 = vrot.slane %v333, %v662
    %v664 = vlaneseq
    %v665 = vshrl.u32 %v664, 7
    %v666 = vsub.s32 %v455, %v665
    %v667 = vrot.slane %v336, %v666
    %v668 = vsel %vm460, %v667, %v663
    %v669 = vlaneseq
    %v670 = vshrl.u32 %v669, 7
    %v671 = vsub.s32 %v450, %v670
    %v672 = vrot.slane %v339, %v671
    %v673 = vlaneseq
    %v674 = vshrl.u32 %v673, 7
    %v675 = vsub.s32 %v455, %v674
    %v676 = vrot.slane %v342, %v675
    %v677 = vsel %vm460, %v676, %v672
    %v678 = vlaneseq
    %v679 = vshrl.u32 %v678, 7
    %v680 = vsub.s32 %v450, %v679
    %v681 = vrot.slane %v345, %v680
    %v682 = vlaneseq
    %v683 = vshrl.u32 %v682, 7
    %v684 = vsub.s32 %v455, %v683
    %v685 = vrot.slane %v348, %v684
    %v686 = vsel %vm460, %v685, %v681
    %v687 = vlaneseq
    %v688 = vshrl.u32 %v687, 7
    %v689 = vsub.s32 %v450, %v688
    %v690 = vrot.slane %v351, %v689
    %v691 = vlaneseq
    %v692 = vshrl.u32 %v691, 7
    %v693 = vsub.s32 %v455, %v692
    %v694 = vrot.slane %v354, %v693
    %v695 = vsel %vm460, %v694, %v690
    %v696 = vlaneseq
    %v697 = vshrl.u32 %v696, 7
    %v698 = vsub.s32 %v450, %v697
    %v699 = vrot.slane %v357, %v698
    %v700 = vlaneseq
    %v701 = vshrl.u32 %v700, 7
    %v702 = vsub.s32 %v455, %v701
    %v703 = vrot.slane %v360, %v702
    %v704 = vsel %vm460, %v703, %v699
    %v705 = vlaneseq
    %v706 = vshrl.u32 %v705, 7
    %v707 = vsub.s32 %v450, %v706
    %v708 = vrot.slane %v363, %v707
    %v709 = vlaneseq
    %v710 = vshrl.u32 %v709, 7
    %v711 = vsub.s32 %v455, %v710
    %v712 = vrot.slane %v366, %v711
    %v713 = vsel %vm460, %v712, %v708
    %v714 = vlaneseq
    %v715 = vshrl.u32 %v714, 7
    %v716 = vsub.s32 %v450, %v715
    %v717 = vrot.slane %v369, %v716
    %v718 = vlaneseq
    %v719 = vshrl.u32 %v718, 7
    %v720 = vsub.s32 %v455, %v719
    %v721 = vrot.slane %v372, %v720
    %v722 = vsel %vm460, %v721, %v717
    %v723 = vlaneseq
    %v724 = vshrl.u32 %v723, 7
    %v725 = vsub.s32 %v450, %v724
    %v726 = vrot.slane %v375, %v725
    %v727 = vlaneseq
    %v728 = vshrl.u32 %v727, 7
    %v729 = vsub.s32 %v455, %v728
    %v730 = vrot.slane %v378, %v729
    %v731 = vsel %vm460, %v730, %v726
    %v732 = vlaneseq
    %v733 = vshrl.u32 %v732, 7
    %v734 = vsub.s32 %v450, %v733
    %v735 = vrot.slane %v381, %v734
    %v736 = vlaneseq
    %v737 = vshrl.u32 %v736, 7
    %v738 = vsub.s32 %v455, %v737
    %v739 = vrot.slane %v384, %v738
    %v740 = vsel %vm460, %v739, %v735
    %vm741 = vcmask 1041409
    %v742 = vsel %vm741, %v470, %v461
    %vm743 = vcmask 1042434
    %v744 = vsel %vm743, %v479, %v742
    %vm745 = vcmask 1043459
    %v746 = vsel %vm745, %v488, %v744
    %vm747 = vcmask 1044484
    %v748 = vsel %vm747, %v497, %v746
    %vm749 = vcmask 1045509
    %v750 = vsel %vm749, %v506, %v748
    %vm751 = vcmask 1046534
    %v752 = vsel %vm751, %v515, %v750
    %vm753 = vcmask 1047559
    %v754 = vsel %vm753, %v524, %v752
    %v755 = vsel %vm741, %v542, %v533
    %v756 = vsel %vm743, %v551, %v755
    %v757 = vsel %vm745, %v560, %v756
    %v758 = vsel %vm747, %v569, %v757
    %v759 = vsel %vm749, %v578, %v758
    %v760 = vsel %vm751, %v587, %v759
    %v761 = vsel %vm753, %v596, %v760
    %v762 = vsel %vm741, %v614, %v605
    %v763 = vsel %vm743, %v623, %v762
    %v764 = vsel %vm745, %v632, %v763
    %v765 = vsel %vm747, %v641, %v764
    %v766 = vsel %vm749, %v650, %v765
    %v767 = vsel %vm751, %v659, %v766
    %v768 = vsel %vm753, %v668, %v767
    %v769 = vsel %vm741, %v686, %v677
    %v770 = vsel %vm743, %v695, %v769
    %v771 = vsel %vm745, %v704, %v770
    %v772 = vsel %vm747, %v713, %v771
    %v773 = vsel %vm749, %v722, %v772
    %v774 = vsel %vm751, %v731, %v773
    %v775 = vsel %vm753, %v740, %v774
    %v780 = vsel %vm192, %v754, 0.0
    %781 = vadd.xlane.f32.xlu0 %v780
    %v782 = vpop.xlane.xlu0 %781
    %v783 = vsel %vm192, %v761, 0.0
    %784 = vadd.xlane.f32.xlu0 %v783
    %v785 = vpop.xlane.xlu0 %784
    %v786 = vsel %vm192, %v768, 0.0
    %787 = vadd.xlane.f32.xlu0 %v786
    %v788 = vpop.xlane.xlu0 %787
    %v789 = vsel %vm192, %v775, 0.0
    %790 = vadd.xlane.f32.xlu0 %v789
    %v791 = vpop.xlane.xlu0 %790
    %v792 = vmul.f32 %v782, 0.00390625
    %v793 = vmul.f32 %v785, 0.00390625
    %v794 = vmul.f32 %v788, 0.00390625
    %v795 = vmul.f32 %v791, 0.00390625
    %v796 = vld [vmem:[%s1] sm:$0xff]
    %v797 = vld [vmem:[%s1 + $0x8] sm:$0xff]
    %v802 = vlaneseq
    %v803 = vshrl.u32 %v802, 7
    %v804 = vsub.s32 %v450, %v803
    %v805 = vrot.slane %v792, %v804
    %v806 = vlaneseq
    %v807 = vshrl.u32 %v806, 7
    %v808 = vsub.s32 %v455, %v807
    %v809 = vrot.slane %v793, %v808
    %v810 = vsel %vm460, %v809, %v805
    %v811 = vlaneseq
    %v812 = vshrl.u32 %v811, 7
    %v813 = vsub.s32 %v450, %v812
    %v814 = vrot.slane %v794, %v813
    %v815 = vlaneseq
    %v816 = vshrl.u32 %v815, 7
    %v817 = vsub.s32 %v455, %v816
    %v818 = vrot.slane %v795, %v817
    %v819 = vsel %vm460, %v818, %v814
    %v820 = vsel %vm741, %v819, %v810
    %v821 = vsel %vm192, %v820, 0
    %823 = vmatprep.subr.mxu0 0.0
    %824 = vmatpush1.msra.mxu0 %v796
    %825 = vmatprep.subr.mxu0 0.0
    %826 = vmatpush1.msra.mxu0 %v797
    %827 = vmatprep.subr.mxu0 0.0
    %828 = vmatpush1.msra.mxu0 0.0
    %829 = vmatprep.subr.mxu0 0.0
    %830 = vmatpush1.msra.mxu0 0.0
    %831 = vmatprep.subr.mxu0 0.0
    %832 = vmatpush1.msra.mxu0 0.0
    %833 = vmatprep.subr.mxu0 0.0
    %834 = vmatpush1.msra.mxu0 0.0
    %835 = vmatprep.subr.mxu0 0.0
    %836 = vmatpush1.msra.mxu0 0.0
    %837 = vmatprep.subr.mxu0 0.0
    %838 = vmatpush1.msra.mxu0 0.0
    %839 = vmatprep.subr.mxu0 0.0
    %840 = vmatpush1.msra.mxu0 0.0
    %841 = vmatprep.subr.mxu0 0.0
    %842 = vmatpush1.msra.mxu0 0.0
    %843 = vmatprep.subr.mxu0 0.0
    %844 = vmatpush1.msra.mxu0 0.0
    %845 = vmatprep.subr.mxu0 0.0
    %846 = vmatpush1.msra.mxu0 0.0
    %847 = vmatprep.subr.mxu0 0.0
    %848 = vmatpush1.msra.mxu0 0.0
    %849 = vmatprep.subr.mxu0 0.0
    %850 = vmatpush1.msra.mxu0 0.0
    %851 = vmatprep.subr.mxu0 0.0
    %852 = vmatpush1.msra.mxu0 0.0
    %853 = vmatprep.subr.mxu0 0.0
    %854 = vmatpush1.msra.mxu0 0.0
    %855 = vmatprep.subr.mxu0 0.0
    %856 = vmatpush1.msra.mxu0 0.0
    %857 = vmatprep.subr.mxu0 0.0
    %858 = vmatpush1.msra.mxu0 0.0
    %859 = vmatprep.subr.mxu0 0.0
    %860 = vmatpush1.msra.mxu0 0.0
    %861 = vmatprep.subr.mxu0 0.0
    %862 = vmatpush1.msra.mxu0 0.0
    %863 = vmatprep.subr.mxu0 0.0
    %864 = vmatpush1.msra.mxu0 0.0
    %865 = vmatprep.subr.mxu0 0.0
    %866 = vmatpush1.msra.mxu0 0.0
    %867 = vmatprep.subr.mxu0 0.0
    %868 = vmatpush1.msra.mxu0 0.0
    %869 = vmatprep.subr.mxu0 0.0
    %870 = vmatpush1.msra.mxu0 0.0
    %871 = vmatprep.subr.mxu0 0.0
    %872 = vmatpush1.msra.mxu0 0.0
    %873 = vmatprep.subr.mxu0 0.0
    %874 = vmatpush1.msra.mxu0 0.0
    %875 = vmatprep.subr.mxu0 0.0
    %876 = vmatpush1.msra.mxu0 0.0
    %877 = vmatprep.subr.mxu0 0.0
    %878 = vmatpush1.msra.mxu0 0.0
    %879 = vmatprep.subr.mxu0 0.0
    %880 = vmatpush1.msra.mxu0 0.0
    %881 = vmatprep.subr.mxu0 0.0
    %882 = vmatpush1.msra.mxu0 0.0
    %883 = vmatprep.subr.mxu0 0.0
    %884 = vmatpush1.msra.mxu0 0.0
    %885 = vmatprep.subr.mxu0 0.0
    %886 = vmatpush1.msra.mxu0 0.0
    %887 = vmatprep.mubr.f32.mxu0 0.0
    %888 = vmatmul.mubr.f32.gmra.mrb[0].mxu0 %v821
    %v889 = vpop.f32.mrb[0].mxu0
    %v890 = vadd.f32 0.0, %v889
    %v891 = vpop.f32.mrb[0].mxu0
    %892 = vdwg.mxu0
    %v893 = vld [vmem:[#allocation7] sm:$0x1]
    %v894 = vadd.f32 %v893, 1e-05
    %v895 = vrsqrt.pop %v894
    %v896 = vld [vmem:[#allocation5] sm:$0x1]
    %v898 = vlaneseq
    %v899 = vshrl.u32 %v898, 7
    %v900 = vsub.s32 0, %v899
    %v901 = vrot.slane %v896, %v900
    %v903 = vsub.f32 %v890, %v901
    %v905 = vlaneseq
    %v906 = vshrl.u32 %v905, 7
    %v907 = vsub.s32 0, %v906
    %v908 = vrot.slane %v895, %v907
    %v910 = vmul.f32 %v903, %v908
    %v911 = vld [vmem:[%s2] sm:$0x1]
    %v913 = vlaneseq
    %v914 = vshrl.u32 %v913, 7
    %v915 = vsub.s32 0, %v914
    %v916 = vrot.slane %v911, %v915
    %v918 = vmul.f32 %v910, %v916
    %v919 = vld [vmem:[%s3] sm:$0x1]
    %v921 = vlaneseq
    %v922 = vshrl.u32 %v921, 7
    %v923 = vsub.s32 0, %v922
    %v924 = vrot.slane %v919, %v923
    %v926 = vadd.f32 %v918, %v924
    %v927 = vmax.f32 %v926, 0.0
    %v928 = vld [vmem:[%s6] sm:$0xff]
    %v929 = vld [vmem:[%s6 + $0x8] sm:$0xff]
    %v930 = vld [vmem:[#allocation8] sm:$0x1]
    %v932 = vlaneseq
    %v933 = vshrl.u32 %v932, 7
    %v934 = vsub.s32 0, %v933
    %v935 = vrot.slane %v930, %v934
    %v938 = vsel %vm192, %v927, 0
    %940 = vmatprep.subr.mxu0 0.0
    %941 = vmatpush1.msra.mxu0 %v928
    %942 = vmatprep.subr.mxu0 0.0
    %943 = vmatpush1.msra.mxu0 %v929
    %944 = vmatprep.subr.mxu0 0.0
    %945 = vmatpush1.msra.mxu0 0.0
    %946 = vmatprep.subr.mxu0 0.0
    %947 = vmatpush1.msra.mxu0 0.0
    %948 = vmatprep.subr.mxu0 0.0
    %949 = vmatpush1.msra.mxu0 0.0
    %950 = vmatprep.subr.mxu0 0.0
    %951 = vmatpush1.msra.mxu0 0.0
    %952 = vmatprep.subr.mxu0 0.0
    %953 = vmatpush1.msra.mxu0 0.0
    %954 = vmatprep.subr.mxu0 0.0
    %955 = vmatpush1.msra.mxu0 0.0
    %956 = vmatprep.subr.mxu0 0.0
    %957 = vmatpush1.msra.mxu0 0.0
    %958 = vmatprep.subr.mxu0 0.0
    %959 = vmatpush1.msra.mxu0 0.0
    %960 = vmatprep.subr.mxu0 0.0
    %961 = vmatpush1.msra.mxu0 0.0
    %962 = vmatprep.subr.mxu0 0.0
    %963 = vmatpush1.msra.mxu0 0.0
    %964 = vmatprep.subr.mxu0 0.0
    %965 = vmatpush1.msra.mxu0 0.0
    %966 = vmatprep.subr.mxu0 0.0
    %967 = vmatpush1.msra.mxu0 0.0
    %968 = vmatprep.subr.mxu0 0.0
    %969 = vmatpush1.msra.mxu0 0.0
    %970 = vmatprep.subr.mxu0 0.0
    %971 = vmatpush1.msra.mxu0 0.0
    %972 = vmatprep.subr.mxu0 0.0
    %973 = vmatpush1.msra.mxu0 0.0
    %974 = vmatprep.subr.mxu0 0.0
    %975 = vmatpush1.msra.mxu0 0.0
    %976 = vmatprep.subr.mxu0 0.0
    %977 = vmatpush1.msra.mxu0 0.0
    %978 = vmatprep.subr.mxu0 0.0
    %979 = vmatpush1.msra.mxu0 0.0
    %980 = vmatprep.subr.mxu0 0.0
    %981 = vmatpush1.msra.mxu0 0.0
    %982 = vmatprep.subr.mxu0 0.0
    %983 = vmatpush1.msra.mxu0 0.0
    %984 = vmatprep.subr.mxu0 0.0
    %985 = vmatpush1.msra.mxu0 0.0
    %986 = vmatprep.subr.mxu0 0.0
    %987 = vmatpush1.msra.mxu0 0.0
    %988 = vmatprep.subr.mxu0 0.0
    %989 = vmatpush1.msra.mxu0 0.0
    %990 = vmatprep.subr.mxu0 0.0
    %991 = vmatpush1.msra.mxu0 0.0
    %992 = vmatprep.subr.mxu0 0.0
    %993 = vmatpush1.msra.mxu0 0.0
    %994 = vmatprep.subr.mxu0 0.0
    %995 = vmatpush1.msra.mxu0 0.0
    %996 = vmatprep.subr.mxu0 0.0
    %997 = vmatpush1.msra.mxu0 0.0
    %998 = vmatprep.subr.mxu0 0.0
    %999 = vmatpush1.msra.mxu0 0.0
    %1000 = vmatprep.subr.mxu0 0.0
    %1001 = vmatpush1.msra.mxu0 0.0
    %1002 = vmatprep.subr.mxu0 0.0
    %1003 = vmatpush1.msra.mxu0 0.0
    %1004 = vmatprep.mubr.f32.mxu0 0.0
    %1005 = vmatmul.mubr.f32.gmra.mrb[0].mxu0 %v938
    %v1006 = vpop.f32.mrb[0].mxu0
    %v1007 = vadd.f32 %v935, %v1006
    %v1008 = vpop.f32.mrb[0].mxu0
    %1009 = vdwg.mxu0
    %v1010 = vxor.u32 %v1007, 2147483648
    %v1011 = vmul.f32 %v1010, 1.442695
    %v1012 = vpow.pop %v1011
    %v1013 = vadd.f32 %v1012, 1.0
    %v1014 = vrcp.pop %v1013
    %v1015 = vmul.f32 1.0, %v1014
    %vm1016 = vcmask 123904
    %1017 = vst.msk [vmem:[#allocation13] sm:$0x3] %vm1016, %v1015
    %v1018 = vld [vmem:[%s8] sm:$0xff]
    %v1019 = vld [vmem:[%s8 + $0x8] sm:$0xff]
    %v1020 = vld [vmem:[#allocation10] sm:$0x1]
    %v1022 = vlaneseq
    %v1023 = vshrl.u32 %v1022, 7
    %v1024 = vsub.s32 0, %v1023
    %v1025 = vrot.slane %v1020, %v1024
    %1027 = vmatprep.subr.mxu0 0.0
    %1028 = vmatpush1.msra.mxu0 %v1018
    %1029 = vmatprep.subr.mxu0 0.0
    %1030 = vmatpush1.msra.mxu0 %v1019
    %1031 = vmatprep.subr.mxu0 0.0
    %1032 = vmatpush1.msra.mxu0 0.0
    %1033 = vmatprep.subr.mxu0 0.0
    %1034 = vmatpush1.msra.mxu0 0.0
    %1035 = vmatprep.subr.mxu0 0.0
    %1036 = vmatpush1.msra.mxu0 0.0
    %1037 = vmatprep.subr.mxu0 0.0
    %1038 = vmatpush1.msra.mxu0 0.0
    %1039 = vmatprep.subr.mxu0 0.0
    %1040 = vmatpush1.msra.mxu0 0.0
    %1041 = vmatprep.subr.mxu0 0.0
    %1042 = vmatpush1.msra.mxu0 0.0
    %1043 = vmatprep.subr.mxu0 0.0
    %1044 = vmatpush1.msra.mxu0 0.0
    %1045 = vmatprep.subr.mxu0 0.0
    %1046 = vmatpush1.msra.mxu0 0.0
    %1047 = vmatprep.subr.mxu0 0.0
    %1048 = vmatpush1.msra.mxu0 0.0
    %1049 = vmatprep.subr.mxu0 0.0
    %1050 = vmatpush1.msra.mxu0 0.0
    %1051 = vmatprep.subr.mxu0 0.0
    %1052 = vmatpush1.msra.mxu0 0.0
    %1053 = vmatprep.subr.mxu0 0.0
    %1054 = vmatpush1.msra.mxu0 0.0
    %1055 = vmatprep.subr.mxu0 0.0
    %1056 = vmatpush1.msra.mxu0 0.0
    %1057 = vmatprep.subr.mxu0 0.0
    %1058 = vmatpush1.msra.mxu0 0.0
    %1059 = vmatprep.subr.mxu0 0.0
    %1060 = vmatpush1.msra.mxu0 0.0
    %1061 = vmatprep.subr.mxu0 0.0
    %1062 = vmatpush1.msra.mxu0 0.0
    %1063 = vmatprep.subr.mxu0 0.0
    %1064 = vmatpush1.msra.mxu0 0.0
    %1065 = vmatprep.subr.mxu0 0.0
    %1066 = vmatpush1.msra.mxu0 0.0
    %1067 = vmatprep.subr.mxu0 0.0
    %1068 = vmatpush1.msra.mxu0 0.0
    %1069 = vmatprep.subr.mxu0 0.0
    %1070 = vmatpush1.msra.mxu0 0.0
    %1071 = vmatprep.subr.mxu0 0.0
    %1072 = vmatpush1.msra.mxu0 0.0
    %1073 = vmatprep.subr.mxu0 0.0
    %1074 = vmatpush1.msra.mxu0 0.0
    %1075 = vmatprep.subr.mxu0 0.0
    %1076 = vmatpush1.msra.mxu0 0.0
    %1077 = vmatprep.subr.mxu0 0.0
    %1078 = vmatpush1.msra.mxu0 0.0
    %1079 = vmatprep.subr.mxu0 0.0
    %1080 = vmatpush1.msra.mxu0 0.0
    %1081 = vmatprep.subr.mxu0 0.0
    %1082 = vmatpush1.msra.mxu0 0.0
    %1083 = vmatprep.subr.mxu0 0.0
    %1084 = vmatpush1.msra.mxu0 0.0
    %1085 = vmatprep.subr.mxu0 0.0
    %1086 = vmatpush1.msra.mxu0 0.0
    %1087 = vmatprep.subr.mxu0 0.0
    %1088 = vmatpush1.msra.mxu0 0.0
    %1089 = vmatprep.subr.mxu0 0.0
    %1090 = vmatpush1.msra.mxu0 0.0
    %1091 = vmatprep.mubr.f32.mxu0 0.0
    %1092 = vmatmul.mubr.f32.gmra.mrb[0].mxu0 %v938
    %v1093 = vpop.f32.mrb[0].mxu0
    %v1094 = vadd.f32 %v1025, %v1093
    %v1095 = vpop.f32.mrb[0].mxu0
    %1096 = vdwg.mxu0
    %v1097 = vxor.u32 %v1094, 2147483648
    %v1098 = vmul.f32 %v1097, 1.442695
    %v1099 = vpow.pop %v1098
    %v1100 = vadd.f32 %v1099, 1.0
    %v1101 = vrcp.pop %v1100
    %v1102 = vmul.f32 1.0, %v1101
    %vm1103 = vcmask 254976
    %1104 = vst.msk [vmem:[#allocation14] sm:$0x3] %vm1103, %v1102
    %v1105 = vld [vmem:[#allocation11] sm:$0xff]
    %v1106 = vld [vmem:[#allocation11 + $0x8] sm:$0xff]
    %v1107 = vld [vmem:[%s11] sm:$0x1]
    %v1109 = vlaneseq
    %v1110 = vshrl.u32 %v1109, 7
    %v1111 = vsub.s32 0, %v1110
    %v1112 = vrot.slane %v1107, %v1111
    %1114 = vmatprep.subr.mxu0 0.0
    %1115 = vmatpush1.msra.mxu0 %v1105
    %1116 = vmatprep.subr.mxu0 0.0
    %1117 = vmatpush1.msra.mxu0 %v1106
    %1118 = vmatprep.subr.mxu0 0.0
    %1119 = vmatpush1.msra.mxu0 0.0
    %1120 = vmatprep.subr.mxu0 0.0
    %1121 = vmatpush1.msra.mxu0 0.0
    %1122 = vmatprep.subr.mxu0 0.0
    %1123 = vmatpush1.msra.mxu0 0.0
    %1124 = vmatprep.subr.mxu0 0.0
    %1125 = vmatpush1.msra.mxu0 0.0
    %1126 = vmatprep.subr.mxu0 0.0
    %1127 = vmatpush1.msra.mxu0 0.0
    %1128 = vmatprep.subr.mxu0 0.0
    %1129 = vmatpush1.msra.mxu0 0.0
    %1130 = vmatprep.subr.mxu0 0.0
    %1131 = vmatpush1.msra.mxu0 0.0
    %1132 = vmatprep.subr.mxu0 0.0
    %1133 = vmatpush1.msra.mxu0 0.0
    %1134 = vmatprep.subr.mxu0 0.0
    %1135 = vmatpush1.msra.mxu0 0.0
    %1136 = vmatprep.subr.mxu0 0.0
    %1137 = vmatpush1.msra.mxu0 0.0
    %1138 = vmatprep.subr.mxu0 0.0
    %1139 = vmatpush1.msra.mxu0 0.0
    %1140 = vmatprep.subr.mxu0 0.0
    %1141 = vmatpush1.msra.mxu0 0.0
    %1142 = vmatprep.subr.mxu0 0.0
    %1143 = vmatpush1.msra.mxu0 0.0
    %1144 = vmatprep.subr.mxu0 0.0
    %1145 = vmatpush1.msra.mxu0 0.0
    %1146 = vmatprep.subr.mxu0 0.0
    %1147 = vmatpush1.msra.mxu0 0.0
    %1148 = vmatprep.subr.mxu0 0.0
    %1149 = vmatpush1.msra.mxu0 0.0
    %1150 = vmatprep.subr.mxu0 0.0
    %1151 = vmatpush1.msra.mxu0 0.0
    %1152 = vmatprep.subr.mxu0 0.0
    %1153 = vmatpush1.msra.mxu0 0.0
    %1154 = vmatprep.subr.mxu0 0.0
    %1155 = vmatpush1.msra.mxu0 0.0
    %1156 = vmatprep.subr.mxu0 0.0
    %1157 = vmatpush1.msra.mxu0 0.0
    %1158 = vmatprep.subr.mxu0 0.0
    %1159 = vmatpush1.msra.mxu0 0.0
    %1160 = vmatprep.subr.mxu0 0.0
    %1161 = vmatpush1.msra.mxu0 0.0
    %1162 = vmatprep.subr.mxu0 0.0
    %1163 = vmatpush1.msra.mxu0 0.0
    %1164 = vmatprep.subr.mxu0 0.0
    %1165 = vmatpush1.msra.mxu0 0.0
    %1166 = vmatprep.subr.mxu0 0.0
    %1167 = vmatpush1.msra.mxu0 0.0
    %1168 = vmatprep.subr.mxu0 0.0
    %1169 = vmatpush1.msra.mxu0 0.0
    %1170 = vmatprep.subr.mxu0 0.0
    %1171 = vmatpush1.msra.mxu0 0.0
    %1172 = vmatprep.subr.mxu0 0.0
    %1173 = vmatpush1.msra.mxu0 0.0
    %1174 = vmatprep.subr.mxu0 0.0
    %1175 = vmatpush1.msra.mxu0 0.0
    %1176 = vmatprep.subr.mxu0 0.0
    %1177 = vmatpush1.msra.mxu0 0.0
    %1178 = vmatprep.mubr.f32.mxu0 0.0
    %1179 = vmatmul.mubr.f32.gmra.mrb[0].mxu0 %v938
    %v1180 = vpop.f32.mrb[0].mxu0
    %v1181 = vadd.f32 %v1112, %v1180
    %v1182 = vpop.f32.mrb[0].mxu0
    %1183 = vdwg.mxu0
    %v1184 = vxor.u32 %v1181, 2147483648
    %v1185 = vmul.f32 %v1184, 1.442695
    %v1186 = vpow.pop %v1185
    %v1187 = vadd.f32 %v1186, 1.0
    %v1188 = vrcp.pop %v1187
    %v1189 = vmul.f32 1.0, %v1188
    %vm1190 = vcmask 66560
    %1191 = vst.msk [vmem:[#allocation16] sm:$0x3] %vm1190, %v1189
    %v1192 = vld [vmem:[%s12] sm:$0xff]
    %v1193 = vld [vmem:[%s12 + $0x8] sm:$0xff]
    %v1194 = vld [vmem:[%s13] sm:$0x1]
    %v1196 = vlaneseq
    %v1197 = vshrl.u32 %v1196, 7
    %v1198 = vsub.s32 0, %v1197
    %v1199 = vrot.slane %v1194, %v1198
    %1201 = vmatprep.subr.mxu0 0.0
    %1202 = vmatpush1.msra.mxu0 %v1192
    %1203 = vmatprep.subr.mxu0 0.0
    %1204 = vmatpush1.msra.mxu0 %v1193
    %1205 = vmatprep.subr.mxu0 0.0
    %1206 = vmatpush1.msra.mxu0 0.0
    %1207 = vmatprep.subr.mxu0 0.0
    %1208 = vmatpush1.msra.mxu0 0.0
    %1209 = vmatprep.subr.mxu0 0.0
    %1210 = vmatpush1.msra.mxu0 0.0
    %1211 = vmatprep.subr.mxu0 0.0
    %1212 = vmatpush1.msra.mxu0 0.0
    %1213 = vmatprep.subr.mxu0 0.0
    %1214 = vmatpush1.msra.mxu0 0.0
    %1215 = vmatprep.subr.mxu0 0.0
    %1216 = vmatpush1.msra.mxu0 0.0
    %1217 = vmatprep.subr.mxu0 0.0
    %1218 = vmatpush1.msra.mxu0 0.0
    %1219 = vmatprep.subr.mxu0 0.0
    %1220 = vmatpush1.msra.mxu0 0.0
    %1221 = vmatprep.subr.mxu0 0.0
    %1222 = vmatpush1.msra.mxu0 0.0
    %1223 = vmatprep.subr.mxu0 0.0
    %1224 = vmatpush1.msra.mxu0 0.0
    %1225 = vmatprep.subr.mxu0 0.0
    %1226 = vmatpush1.msra.mxu0 0.0
    %1227 = vmatprep.subr.mxu0 0.0
    %1228 = vmatpush1.msra.mxu0 0.0
    %1229 = vmatprep.subr.mxu0 0.0
    %1230 = vmatpush1.msra.mxu0 0.0
    %1231 = vmatprep.subr.mxu0 0.0
    %1232 = vmatpush1.msra.mxu0 0.0
    %1233 = vmatprep.subr.mxu0 0.0
    %1234 = vmatpush1.msra.mxu0 0.0
    %1235 = vmatprep.subr.mxu0 0.0
    %1236 = vmatpush1.msra.mxu0 0.0
    %1237 = vmatprep.subr.mxu0 0.0
    %1238 = vmatpush1.msra.mxu0 0.0
    %1239 = vmatprep.subr.mxu0 0.0
    %1240 = vmatpush1.msra.mxu0 0.0
    %1241 = vmatprep.subr.mxu0 0.0
    %1242 = vmatpush1.msra.mxu0 0.0
    %1243 = vmatprep.subr.mxu0 0.0
    %1244 = vmatpush1.msra.mxu0 0.0
    %1245 = vmatprep.subr.mxu0 0.0
    %1246 = vmatpush1.msra.mxu0 0.0
    %1247 = vmatprep.subr.mxu0 0.0
    %1248 = vmatpush1.msra.mxu0 0.0
    %1249 = vmatprep.subr.mxu0 0.0
    %1250 = vmatpush1.msra.mxu0 0.0
    %1251 = vmatprep.subr.mxu0 0.0
    %1252 = vmatpush1.msra.mxu0 0.0
    %1253 = vmatprep.subr.mxu0 0.0
    %1254 = vmatpush1.msra.mxu0 0.0
    %1255 = vmatprep.subr.mxu0 0.0
    %1256 = vmatpush1.msra.mxu0 0.0
    %1257 = vmatprep.subr.mxu0 0.0
    %1258 = vmatpush1.msra.mxu0 0.0
    %1259 = vmatprep.subr.mxu0 0.0
    %1260 = vmatpush1.msra.mxu0 0.0
    %1261 = vmatprep.subr.mxu0 0.0
    %1262 = vmatpush1.msra.mxu0 0.0
    %1263 = vmatprep.subr.mxu0 0.0
    %1264 = vmatpush1.msra.mxu0 0.0
    %1265 = vmatprep.mubr.f32.mxu0 0.0
    %1266 = vmatmul.mubr.f32.gmra.mrb[0].mxu0 %v938
    %v1267 = vpop.f32.mrb[0].mxu0
    %v1268 = vadd.f32 %v1199, %v1267
    %v1269 = vpop.f32.mrb[0].mxu0
    %1270 = vdwg.mxu0
    %vm1271 = vcmask 25600
    %v1272 = vsel %vm1271, %v1268, -inf
    %1273 = vmax.xlane.f32.xlu0 %v1272
    %v1274 = vpop.xlane.xlu0 %1273
    %v1275 = vsub.f32 %v1268, %v1274
    %v1276 = vmul.f32 %v1275, 1.442695
    %v1277 = vpow.pop %v1276
    %v1278 = vsel %vm1271, %v1277, 0.0
    %1279 = vadd.xlane.f32.xlu0 %v1278
    %v1280 = vpop.xlane.xlu0 %1279
    %v1281 = vrcp.pop %v1280
    %v1282 = vmul.f32 %v1277, %v1281
    %1283 = vst.msk [vmem:[#allocation17] sm:$0x3] %vm1271, %v1282
    // Predicated region
    $region82: #{tpu_custom_call.1} parent=1 // pred_check
      _
    $region83: #{tpu_custom_call.1} parent=1 // pred_check_branch
      %1285 = sbr.rel (0) target = $region85
    $region84: #{tpu_custom_call.1} parent=1 // pred_region
      %s1287 = ssub.s32 32, 32
      %1288 = vsyncadd [#allocation4], %s1287
      %s1290 = sshll.u32 [#allocation13], 4
      %s1291 = int_to_ptr.vmem [resolvable:$true] %s1290
      %1293 = dma.vmem_to_hbm [thread:$0]  %s1291, 32, %s14, [#allocation4]
    $region85: #{tpu_custom_call.1} parent=1 // pred_fallthru
      _
    // Predicated region
    $region86: #{tpu_custom_call.1} parent=1 // pred_check
      _
    $region87: #{tpu_custom_call.1} parent=1 // pred_check_branch
      %1295 = sbr.rel (0) target = $region89
    $region88: #{tpu_custom_call.1} parent=1 // pred_region
      %s1297 = ssub.s32 32, 32
      %1298 = vsyncadd [#allocation15], %s1297
      %s1300 = sshll.u32 [#allocation14], 4
      %s1301 = int_to_ptr.vmem [resolvable:$true] %s1300
      %1303 = dma.vmem_to_hbm [thread:$0]  %s1301, 32, %s15, [#allocation15]
    $region89: #{tpu_custom_call.1} parent=1 // pred_fallthru
      _
    // Predicated region
    $region90: #{tpu_custom_call.1} parent=1 // pred_check
      _
    $region91: #{tpu_custom_call.1} parent=1 // pred_check_branch
      %1305 = sbr.rel (0) target = $region93
    $region92: #{tpu_custom_call.1} parent=1 // pred_region
      %s1307 = ssub.s32 32, 32
      %1308 = vsyncadd [#allocation15], %s1307
      %s1310 = sshll.u32 [#allocation16], 4
      %s1311 = int_to_ptr.vmem [resolvable:$true] %s1310
      %1313 = dma.vmem_to_hbm [thread:$0]  %s1311, 32, %s16, [#allocation15]
    $region93: #{tpu_custom_call.1} parent=1 // pred_fallthru
      _
    // Predicated region
    $region94: #{tpu_custom_call.1} parent=1 // pred_check
      _
    $region95: #{tpu_custom_call.1} parent=1 // pred_check_branch
      %1315 = sbr.rel (0) target = $region97
    $region96: #{tpu_custom_call.1} parent=1 // pred_region
      %s1317 = ssub.s32 32, 32
      %1318 = vsyncadd [#allocation18], %s1317
      %s1320 = sshll.u32 [#allocation17], 4
      %s1321 = int_to_ptr.vmem [resolvable:$true] %s1320
      %1323 = dma.vmem_to_hbm [thread:$0]  %s1321, 32, %s17, [#allocation18]
    $region97: #{tpu_custom_call.1} parent=1 // pred_fallthru
      _
    // Predicated region
    $region98: #{tpu_custom_call.1} parent=1 // pred_check
      _
    $region99: #{tpu_custom_call.1} parent=1 // pred_check_branch
      %1325 = sbr.rel (0) target = $region101
    $region100: #{tpu_custom_call.1} parent=1 // pred_region
      %1326 = dma.done [#allocation4], 32
    $region101: #{tpu_custom_call.1} parent=1 // pred_fallthru
      _
    // Predicated region
    $region102: #{tpu_custom_call.1} parent=1 // pred_check
      _
    $region103: #{tpu_custom_call.1} parent=1 // pred_check_branch
      %1328 = sbr.rel (0) target = $region105
    $region104: #{tpu_custom_call.1} parent=1 // pred_region
      %1329 = dma.done [#allocation15], 32
    $region105: #{tpu_custom_call.1} parent=1 // pred_fallthru
      _
    // Predicated region
    $region106: #{tpu_custom_call.1} parent=1 // pred_check
      _
    $region107: #{tpu_custom_call.1} parent=1 // pred_check_branch
      %1331 = sbr.rel (0) target = $region109
    $region108: #{tpu_custom_call.1} parent=1 // pred_region
      %1332 = dma.done [#allocation15], 32
    $region109: #{tpu_custom_call.1} parent=1 // pred_fallthru
      _
    // Predicated region
    $region110: #{tpu_custom_call.1} parent=1 // pred_check
      _
    $region111: #{tpu_custom_call.1} parent=1 // pred_check_branch
      %1334 = sbr.rel (0) target = $region113
    $region112: #{tpu_custom_call.1} parent=1 // pred_region
      %1335 = dma.done [#allocation18], 32
    $region113: #{tpu_custom_call.1} parent=1 // pred_fallthru
      _
    %1336 = vsyncpa [#allocation3], 1
    %1337 = vsyncpa [#allocation6], 1
    %1338 = vsyncpa [#allocation9], 1
    %1339 = vsyncpa [#allocation12], 1
    %1340 = vsyncpa [#allocation4], 1
    %1341 = vsyncpa [#allocation15], 1
    %1342 = vsyncpa [#allocation18], 1

</llo_original>
